<compile_context>
chip_gen: v7x
topology: tpu7x:2x2x1
jax: 0.10.0
libtpu: 0.0.40
codegen_flags: <defaults>
</compile_context>

<pallas_src>
import functools

import numpy as np

import jax
import jax.numpy as jnp
from jax import lax
from jax.experimental import pallas as pl
from jax.experimental.pallas import tpu as pltpu


def _round_up(x, m):
    return (x + m - 1) // m * m


@functools.lru_cache(maxsize=None)
def _vmem_limit_bytes():
    """Scoped-VMEM limit: ~75% of physical VMEM so the tiling adapts to the
    64 MiB v7x parts as well as the 128 MiB v5e/v6e parts."""
    cap = 64 * 1024 * 1024
    try:
        info = pltpu.get_tpu_info()
        cap = int(getattr(info, "vmem_capacity_bytes", cap)) or cap
    except Exception:
        pass
    return max(32 * 1024 * 1024, min(cap * 3 // 4, 112 * 1024 * 1024))


@functools.lru_cache(maxsize=None)
def _buffered_one_supported():
    """Feature-probe pl.Buffered(1) (single-buffered constant-index input) on a
    tiny standalone kernel.  This replaces the old bare try/except around the
    real kernel: lack of support can no longer mask genuine compile errors of
    the main kernel, and the double-buffered fallback is only taken when
    single-buffering truly is unavailable."""

    def _probe(x_ref, o_ref):
        o_ref[...] = x_ref[...] + 1.0

    try:
        out = pl.pallas_call(
            _probe,
            out_shape=jax.ShapeDtypeStruct((8, 128), jnp.float32),
            grid_spec=pltpu.PrefetchScalarGridSpec(
                num_scalar_prefetch=0,
                grid=(1,),
                in_specs=[pl.BlockSpec((8, 128), lambda i: (0, 0),
                                       pipeline_mode=pl.Buffered(1))],
                out_specs=pl.BlockSpec((8, 128), lambda i: (0, 0)),
            ),
        )(jnp.zeros((8, 128), jnp.float32))
        jax.block_until_ready(out)
        return bool(jnp.all(out == 1.0))
    except Exception:
        return False


def _pad_gate_cols(w, hidden, hidden_p):
    """(rows, 4*hidden) -> (rows, 4*hidden_p); gate k lands at columns
    [k*Hp, k*Hp + hidden).  Skipped entirely when hidden is lane-aligned."""
    if hidden_p == hidden:
        return w
    rows = w.shape[0]
    out = jnp.zeros((rows, 4 * hidden_p), w.dtype)
    for k in range(4):
        out = out.at[:, k * hidden_p:k * hidden_p + hidden].set(
            w[:, k * hidden:(k + 1) * hidden])
    return out


def _select_t_chunk(seq_len, bb, d_in, hidden_p, elt, vmem_limit, target,
                    w_buffers):
    """Largest t_chunk <= target whose VMEM footprint (double-buffered x block,
    f32 gx scratch, weights, state, outputs) fits the per-chip budget."""
    G = 4 * hidden_p
    per_tc = 2 * bb * d_in * elt + bb * G * 4          # x block (2 bufs) + gx scratch
    fixed = (w_buffers * hidden_p * G * elt            # wh
             + w_buffers * d_in * G * elt              # wx
             + w_buffers * G * 4                       # bias
             + 2 * 2 * bb * hidden_p * 4               # h/c outputs (2 bufs each)
             + 2 * bb * hidden_p * 4)                  # h/c state scratch
    budget = int(vmem_limit * 0.85) - fixed - (2 << 20)
    tc = budget // per_tc if per_tc > 0 else target
    return int(max(1, min(target, tc, seq_len)))


def _lstm_kernel(x_ref, wx_ref, wh_ref, b_ref, h_out_ref, c_out_ref,
                 gx_scr, h_scr, c_scr, *,
                 hidden_p, t_chunk, seq_len, compute_dtype):
    """One grid step = t_chunk timesteps of the LSTM for one batch block.

    x_ref  : (tc, bb, D)    inputs for this time chunk       (compute_dtype)
    wx_ref : (D, 4*Hp)      input-projection weights         (compute_dtype)
    wh_ref : (Hp, 4*Hp)     recurrent weights                (compute_dtype)
    b_ref  : (1, 4*Hp)      bias, forget_bias folded into f  (f32)
    gx_scr : (tc*bb, 4*Hp)  per-chunk x@Wx + b               (f32 VMEM scratch)
    h_scr / c_scr : (bb, Hp) persistent recurrent state      (f32 VMEM scratch)
    """
    t = pl.program_id(1)
    Hp = hidden_p
    tc = t_chunk
    bb = h_scr.shape[0]
    D = x_ref.shape[-1]

    # Zero-init the recurrent state at the start of the time loop.
    @pl.when(t == 0)
    def _():
        h_scr[...] = jnp.zeros_like(h_scr)
        c_scr[...] = jnp.zeros_like(c_scr)

    # Fused input projection for the whole chunk: a single
    # (tc*bb, D) x (D, 4*Hp) MXU matmul (large M) -> no gx HBM round-trip.
    x2d = x_ref[...].reshape(tc * bb, D)
    gx_scr[...] = jnp.dot(x2d, wx_ref[...],
                          preferred_element_type=jnp.float32) + b_ref[...]

    wh = wh_ref[...]                       # loaded once, reused across the unrolled loop
    ragged = (seq_len % tc) != 0
    nl = compute_dtype                     # bf16 sigmoid/tanh on v6e/v7x; f32 on f32 path

    def _sig(v):
        return jax.nn.sigmoid(v.astype(nl)).astype(jnp.float32)

    def _tanh(v):
        return jnp.tanh(v.astype(nl)).astype(jnp.float32)

    def step(s, carry):
        h, c = carry
        row = pl.multiple_of(s * bb, 8)    # bb is a multiple of 8
        gates = gx_scr[pl.ds(row, bb), :] + jnp.dot(
            h.astype(compute_dtype), wh, preferred_element_type=jnp.float32)
        i_g = gates[:, 0 * Hp:1 * Hp]
        f_g = gates[:, 1 * Hp:2 * Hp]      # forget_bias already folded into the bias
        j_g = gates[:, 2 * Hp:3 * Hp]
        o_g = gates[:, 3 * Hp:4 * Hp]
        # c-state update stays f32; only the gate nonlinearities use `nl`.
        c_new = c * _sig(f_g) + _sig(i_g) * _tanh(j_g)
        h_new = _tanh(c_new) * _sig(o_g)
        if ragged:                          # mask zero-padded tail timesteps
            valid = (t * tc + s) < seq_len
            h_new = jnp.where(valid, h_new, h)
            c_new = jnp.where(valid, c_new, c)
        return h_new, c_new

    h, c = lax.fori_loop(0, tc, step, (h_scr[...], c_scr[...]), unroll=True)
    h_scr[...] = h
    c_scr[...] = c

    # Final state for this batch block is written on the last time chunk.
    @pl.when(t == pl.num_programs(1) - 1)
    def _():
        h_out_ref[...] = h.astype(h_out_ref.dtype)
        c_out_ref[...] = c.astype(c_out_ref.dtype)


def lstm_forward(x, wx_t, wh_t, b, *, forget_bias=1.0,
                 compute_dtype=jnp.bfloat16, t_chunk=16, batch_block=None):
    """Run the LSTM over the full sequence.

    x:    (seq_len, batch, input_dim)  float32
    wx_t: (input_dim, 4*hidden_dim)    (transpose of nn.Linear weight)
    wh_t: (hidden_dim, 4*hidden_dim)
    b:    (1, 4*hidden_dim)
    returns (h, (h, c)) with h, c of shape (batch, hidden_dim)
    """
    seq_len, batch, input_dim = x.shape
    hidden = wh_t.shape[0]
    four_h = 4 * hidden
    assert seq_len >= 1 and batch >= 1
    assert wx_t.shape == (input_dim, four_h)
    assert wh_t.shape == (hidden, four_h)
    assert b.shape == (1, four_h)

    # Lane-align hidden (gate slices land on 128-lane boundaries), sublane-align
    # batch.  Padding copies are skipped when shapes are already aligned.
    Hp = _round_up(hidden, 128)
    Bp = _round_up(batch, 8)
    G = 4 * Hp
    D = input_dim

    wx_p = _pad_gate_cols(wx_t, hidden, Hp)
    wh_p = _pad_gate_cols(wh_t, hidden, Hp)
    if Hp != hidden:
        wh_p = jnp.zeros((Hp, G), wh_p.dtype).at[:hidden].set(wh_p)
    # Fold forget_bias into the f-gate bias.  Padded gate columns of the bias
    # MUST stay exactly zero (a nonzero padded f column would corrupt padded c
    # lanes via sigmoid(f)); _pad_gate_cols guarantees this by construction.
    b_p = _pad_gate_cols(b, hidden, Hp).astype(jnp.float32)
    b_p = b_p.at[:, Hp:Hp + hidden].add(jnp.float32(forget_bias))

    # Batch-block selection.  Default: split into 2 "parallel" blocks (>=128
    # rows each) when batch allows, so both v7x TensorCores get work; otherwise
    # keep one block to maximize the matmul M dimension.
    if batch_block is None:
        bb = Bp // 2 if (Bp >= 256 and (Bp // 2) % 8 == 0) else Bp
    else:
        bb = max(8, _round_up(min(batch_block, Bp), 8))
        if Bp % bb != 0:
            bb = Bp
    nb = Bp // bb

    # Weight buffering + time-chunk size from the per-chip VMEM budget.
    w_buffers = 1 if _buffered_one_supported() else 2
    vmem_limit = _vmem_limit_bytes()
    elt = np.dtype(compute_dtype).itemsize
    tc = _select_t_chunk(seq_len, bb, D, Hp, elt, vmem_limit,
                         max(1, int(t_chunk)), w_buffers)
    num_chunks = -(-seq_len // tc)
    T_pad = num_chunks * tc

    # Pad x only when actually required; padded batch rows stay zero and padded
    # timesteps are masked inside the kernel.
    if T_pad != seq_len or Bp != batch:
        x_p = jnp.zeros((T_pad, Bp, D), x.dtype).at[:seq_len, :batch].set(x)
    else:
        x_p = x
    x_k = x_p.astype(compute_dtype)
    wx_k = wx_p.astype(compute_dtype)
    wh_k = wh_p.astype(compute_dtype)

    kernel = functools.partial(
        _lstm_kernel, hidden_p=Hp, t_chunk=tc, seq_len=seq_len,
        compute_dtype=compute_dtype)

    cost = pl.CostEstimate(
        flops=int(2 * T_pad * Bp * (D + Hp) * G + 10 * T_pad * Bp * Hp),
        transcendentals=int(5 * T_pad * Bp * Hp),
        bytes_accessed=int(x_k.size * elt + (wx_k.size + wh_k.size) * elt
                           + b_p.size * 4 + 2 * Bp * Hp * 4),
    )

    def const_spec(shape):
        # Weights/bias: constant index_map -> DMA'd once.  Single-buffer when
        # supported so the (possibly large) wh tile is resident only once.
        if w_buffers == 1:
            return pl.BlockSpec(shape, lambda bi, ti: (0, 0),
                                pipeline_mode=pl.Buffered(1))
        return pl.BlockSpec(shape, lambda bi, ti: (0, 0))

    h_p, c_p = pl.pallas_call(
        kernel,
        out_shape=(jax.ShapeDtypeStruct((Bp, Hp), jnp.float32),
                   jax.ShapeDtypeStruct((Bp, Hp), jnp.float32)),
        grid_spec=pltpu.PrefetchScalarGridSpec(
            num_scalar_prefetch=0,
            grid=(nb, num_chunks),
            in_specs=[
                pl.BlockSpec((tc, bb, D), lambda bi, ti: (ti, bi, 0)),
                const_spec((D, G)),
                const_spec((Hp, G)),
                const_spec((1, G)),
            ],
            out_specs=[
                pl.BlockSpec((bb, Hp), lambda bi, ti: (bi, 0)),
                pl.BlockSpec((bb, Hp), lambda bi, ti: (bi, 0)),
            ],
            scratch_shapes=[
                pltpu.VMEM((tc * bb, G), jnp.float32),   # per-chunk x@Wx + b
                pltpu.VMEM((bb, Hp), jnp.float32),       # h state
                pltpu.VMEM((bb, Hp), jnp.float32),       # c state
            ],
        ),
        compiler_params=pltpu.CompilerParams(
            dimension_semantics=("parallel", "arbitrary"),
            vmem_limit_bytes=vmem_limit),
        cost_estimate=cost,
    )(x_k, wx_k, wh_k, b_p)

    h = h_p[:batch, :hidden]
    c = c_p[:batch, :hidden]
    return h, (h, c)


def lstm_reference(x, wx_t, wh_t, b, *, forget_bias=1.0):
    """Pure-JAX reference matching the PyTorch forward semantics."""
    seq_len, batch, _ = x.shape
    hidden_dim = wh_t.shape[0]
    h = jnp.zeros((batch, hidden_dim), jnp.float32)
    c = jnp.zeros((batch, hidden_dim), jnp.float32)
    for t in range(seq_len):
        gates = x[t] @ wx_t + h @ wh_t + b
        i, f, j, o = jnp.split(gates, 4, axis=1)
        g = jnp.tanh(j)
        f = f + forget_bias
        c = c * jax.nn.sigmoid(f) + jax.nn.sigmoid(i) * g
        h = jnp.tanh(c) * jax.nn.sigmoid(o)
    return h, (h, c)


if __name__ == "__main__":
    key = jax.random.PRNGKey(0)
    ortho = jax.nn.initializers.orthogonal()

    def make_params(k, input_dim, hidden_dim):
        kwx, kwh = jax.random.split(k)
        # Deterministic orthogonal init (as in reset_parameters); weights are
        # stored transposed relative to nn.Linear ((in, 4H) here).
        wx_t = ortho(kwx, (4 * hidden_dim, input_dim), jnp.float32).T
        wh_t = ortho(kwh, (4 * hidden_dim, hidden_dim), jnp.float32).T
        b = jnp.zeros((1, 4 * hidden_dim), jnp.float32)   # wh.bias init = 0
        return wx_t, wh_t, b

    # --- case 1: module-default small shapes; f32 (tight) + bf16 (loose) ----
    seq_len, batch, input_dim, hidden_dim = 8, 2, 16, 32
    kx, kp = jax.random.split(key)
    x = jax.random.normal(kx, (seq_len, batch, input_dim), jnp.float32)
    wx_t, wh_t, b = make_params(kp, input_dim, hidden_dim)
    h_ref, (_, c_ref) = lstm_reference(x, wx_t, wh_t, b, forget_bias=1.0)

    h32, (_, c32) = lstm_forward(x, wx_t, wh_t, b, forget_bias=1.0,
                                 compute_dtype=jnp.float32)
    jax.block_until_ready((h32, c32))
    assert jnp.allclose(h32, h_ref, atol=1e-4), "h mismatch vs reference (f32)"
    assert jnp.allclose(c32, c_ref, atol=1e-4), "c mismatch vs reference (f32)"

    hbf, (_, cbf) = lstm_forward(x, wx_t, wh_t, b, forget_bias=1.0,
                                 compute_dtype=jnp.bfloat16)
    jax.block_until_ready((hbf, cbf))
    assert jnp.allclose(hbf, h_ref, atol=5e-2, rtol=5e-2), "h mismatch (bf16)"
    assert jnp.allclose(cbf, c_ref, atol=5e-2, rtol=5e-2), "c mismatch (bf16)"

    # --- case 2: ragged time (seq_len not a multiple of t_chunk), f32 tight --
    seq_len2 = 10
    kx2, _ = jax.random.split(kp)
    x2 = jax.random.normal(kx2, (seq_len2, batch, input_dim), jnp.float32)
    h_ref2, (_, c_ref2) = lstm_reference(x2, wx_t, wh_t, b, forget_bias=1.0)
    h2, (_, c2) = lstm_forward(x2, wx_t, wh_t, b, forget_bias=1.0,
                               compute_dtype=jnp.float32, t_chunk=4)
    jax.block_until_ready((h2, c2))
    assert jnp.allclose(h2, h_ref2, atol=1e-4), "h mismatch (ragged tail)"
    assert jnp.allclose(c2, c_ref2, atol=1e-4), "c mismatch (ragged tail)"

    # --- case 3: multiple batch blocks on the parallel grid axis, f32 tight --
    batch3 = 16
    kx3, _ = jax.random.split(kx2)
    x3 = jax.random.normal(kx3, (seq_len, batch3, input_dim), jnp.float32)
    h_ref3, (_, c_ref3) = lstm_reference(x3, wx_t, wh_t, b, forget_bias=1.0)
    h3, (_, c3) = lstm_forward(x3, wx_t, wh_t, b, forget_bias=1.0,
                               compute_dtype=jnp.float32, batch_block=8)
    jax.block_until_ready((h3, c3))
    assert jnp.allclose(h3, h_ref3, atol=1e-4), "h mismatch (batch blocks)"
    assert jnp.allclose(c3, c_ref3, atol=1e-4), "c mismatch (batch blocks)"

    print("KERNEL_OK")
</pallas_src>

<mosaic_0001>
module attributes {stable_mosaic.version = 11 : i64} {
  func.func @_probe(%arg0: i32, %arg1: memref<8x128xf32, #tpu.memory_space<vmem>>, %arg2: memref<8x128xf32, #tpu.memory_space<vmem>>) attributes {dimension_semantics = [#tpu.dimension_semantics<arbitrary>], iteration_bounds = array<i64: 1>, scalar_prefetch = 0 : i64, scratch_operands = 0 : i64, tpu.core_type = #tpu.core_type<tc>, window_params = [{pipeline_mode = #tpu.pipeline_mode<synchronous>, transform_indices = @transform_0, window_bounds = array<i64: 8, 128>}, {pipeline_mode = #tpu.pipeline_mode<synchronous>, transform_indices = @transform_1, window_bounds = array<i64: 8, 128>}]} {
    %c0 = arith.constant 0 : index
    %c0_0 = arith.constant 0 : index
    %0 = vector.load %arg1[%c0, %c0_0] : memref<8x128xf32, #tpu.memory_space<vmem>>, vector<8x128xf32>
    %cst = arith.constant 1.000000e+00 : f32
    %1 = vector.broadcast %cst : f32 to vector<8x128xf32>
    %2 = arith.addf %0, %1 : vector<8x128xf32>
    %c0_1 = arith.constant 0 : index
    %c0_2 = arith.constant 0 : index
    %3 = vector.load %arg2[%c0_1, %c0_2] : memref<8x128xf32, #tpu.memory_space<vmem>>, vector<8x128xf32>
    tpu.vector_store %arg2[%c0_1, %c0_2], %2 {strides = array<i32>} : memref<8x128xf32, #tpu.memory_space<vmem>>, vector<8x128xf32>,
    return
  }
  func.func @transform_0(%arg0: i32) -> (i32, i32) {
    %c0_i32 = arith.constant 0 : i32
    %c0_i32_0 = arith.constant 0 : i32
    %c0_i32_1 = arith.constant 0 : i32
    return %c0_i32, %c0_i32_0 : i32, i32
  }
  func.func @transform_1(%arg0: i32) -> (i32, i32) {
    %c0_i32 = arith.constant 0 : i32
    %c0_i32_0 = arith.constant 0 : i32
    %c0_i32_1 = arith.constant 0 : i32
    return %c0_i32, %c0_i32_0 : i32, i32
  }
}

module attributes {stable_mosaic.version = 11 : i64} {
  func.func @_lstm_kernel(%arg0: i32, %arg1: i32, %arg2: memref<8x8x16xf32, #tpu.memory_space<vmem>>, %arg3: memref<16x512xf32, #tpu.memory_space<vmem>>, %arg4: memref<128x512xf32, #tpu.memory_space<vmem>>, %arg5: memref<1x512xf32, #tpu.memory_space<vmem>>, %arg6: memref<8x128xf32, #tpu.memory_space<vmem>>, %arg7: memref<8x128xf32, #tpu.memory_space<vmem>>, %arg8: memref<64x512xf32, #tpu.memory_space<vmem>>, %arg9: memref<8x128xf32, #tpu.memory_space<vmem>>, %arg10: memref<8x128xf32, #tpu.memory_space<vmem>>) attributes {dimension_semantics = [#tpu.dimension_semantics<parallel>, #tpu.dimension_semantics<arbitrary>], iteration_bounds = array<i64: 1, 1>, scalar_prefetch = 0 : i64, scratch_operands = 3 : i64, tpu.core_type = #tpu.core_type<tc>, window_params = [{transform_indices = @transform_0, window_bounds = array<i64: 8, 8, 16>}, {pipeline_mode = #tpu.pipeline_mode<synchronous>, transform_indices = @transform_1, window_bounds = array<i64: 16, 512>}, {pipeline_mode = #tpu.pipeline_mode<synchronous>, transform_indices = @transform_2, window_bounds = array<i64: 128, 512>}, {pipeline_mode = #tpu.pipeline_mode<synchronous>, transform_indices = @transform_3, window_bounds = array<i64: 1, 512>}, {transform_indices = @transform_4, window_bounds = array<i64: 8, 128>}, {transform_indices = @transform_5, window_bounds = array<i64: 8, 128>}]} {
    %c0_i32 = arith.constant 0 : i32
    %0 = arith.cmpi eq, %arg1, %c0_i32 : i32
    %1 = arith.extui %0 : i1 to i32
    %c0_i32_0 = arith.constant 0 : i32
    %2 = arith.cmpi ne, %1, %c0_i32_0 : i32
    scf.if %2 {
      %cst_70 = arith.constant 0.000000e+00 : f32
      %267 = vector.broadcast %cst_70 : f32 to vector<8x128xf32>
      %c0_71 = arith.constant 0 : index
      %c0_72 = arith.constant 0 : index
      %268 = vector.load %arg9[%c0_71, %c0_72] : memref<8x128xf32, #tpu.memory_space<vmem>>, vector<8x128xf32>
      tpu.vector_store %arg9[%c0_71, %c0_72], %267 {strides = array<i32>} : memref<8x128xf32, #tpu.memory_space<vmem>>, vector<8x128xf32>,
      %cst_73 = arith.constant 0.000000e+00 : f32
      %269 = vector.broadcast %cst_73 : f32 to vector<8x128xf32>
      %c0_74 = arith.constant 0 : index
      %c0_75 = arith.constant 0 : index
      %270 = vector.load %arg10[%c0_74, %c0_75] : memref<8x128xf32, #tpu.memory_space<vmem>>, vector<8x128xf32>
      tpu.vector_store %arg10[%c0_74, %c0_75], %269 {strides = array<i32>} : memref<8x128xf32, #tpu.memory_space<vmem>>, vector<8x128xf32>,
    } else {
    }
    %c0 = arith.constant 0 : index
    %c0_1 = arith.constant 0 : index
    %c0_2 = arith.constant 0 : index
    %3 = vector.load %arg2[%c0, %c0_1, %c0_2] : memref<8x8x16xf32, #tpu.memory_space<vmem>>, vector<8x8x16xf32>
    %4 = vector.shape_cast %3 : vector<8x8x16xf32> to vector<64x16xf32>
    %c0_3 = arith.constant 0 : index
    %c0_4 = arith.constant 0 : index
    %5 = vector.load %arg3[%c0_3, %c0_4] : memref<16x512xf32, #tpu.memory_space<vmem>>, vector<16x512xf32>
    %cst = arith.constant dense<0.000000e+00> : vector<64x512xf32>
    %6 = tpu.matmul %4, %5, %cst {dimension_numbers = #tpu.dot_dimension_numbers<[1], [0], [0], [1], [0, 0, 1, 1], [], []>} : vector<64x16xf32>, vector<16x512xf32>, vector<64x512xf32> -> vector<64x512xf32>
    %c0_5 = arith.constant 0 : index
    %c0_6 = arith.constant 0 : index
    %7 = vector.load %arg5[%c0_5, %c0_6] : memref<1x512xf32, #tpu.memory_space<vmem>>, vector<1x512xf32>
    %8 = vector.broadcast %7 : vector<1x512xf32> to vector<64x512xf32>
    %9 = arith.addf %6, %8 : vector<64x512xf32>
    %c0_7 = arith.constant 0 : index
    %c0_8 = arith.constant 0 : index
    %10 = vector.load %arg8[%c0_7, %c0_8] : memref<64x512xf32, #tpu.memory_space<vmem>>, vector<64x512xf32>
    tpu.vector_store %arg8[%c0_7, %c0_8], %9 {strides = array<i32>} : memref<64x512xf32, #tpu.memory_space<vmem>>, vector<64x512xf32>,
    %c0_9 = arith.constant 0 : index
    %c0_10 = arith.constant 0 : index
    %11 = vector.load %arg4[%c0_9, %c0_10] : memref<128x512xf32, #tpu.memory_space<vmem>>, vector<128x512xf32>
    %c0_11 = arith.constant 0 : index
    %c0_12 = arith.constant 0 : index
    %12 = vector.load %arg9[%c0_11, %c0_12] : memref<8x128xf32, #tpu.memory_space<vmem>>, vector<8x128xf32>
    %c0_13 = arith.constant 0 : index
    %c0_14 = arith.constant 0 : index
    %13 = vector.load %arg10[%c0_13, %c0_14] : memref<8x128xf32, #tpu.memory_space<vmem>>, vector<8x128xf32>
    %c0_i32_15 = arith.constant 0 : i32
    %c8_i32 = arith.constant 8 : i32
    %14 = arith.muli %c0_i32_15, %c8_i32 : i32
    %15 = tpu.assume_multiple %14, 8 : i32
    %16 = arith.index_cast %15 : i32 to index
    %c0_16 = arith.constant 0 : index
    %17 = vector.load %arg8[%16, %c0_16] : memref<64x512xf32, #tpu.memory_space<vmem>>, vector<8x512xf32>
    %cst_17 = arith.constant dense<0.000000e+00> : vector<8x512xf32>
    %18 = tpu.matmul %12, %11, %cst_17 {dimension_numbers = #tpu.dot_dimension_numbers<[1], [0], [0], [1], [0, 0, 1, 1], [], []>} : vector<8x128xf32>, vector<128x512xf32>, vector<8x512xf32> -> vector<8x512xf32>
    %19 = arith.addf %17, %18 : vector<8x512xf32>
    %20 = vector.extract_strided_slice %19 {offsets = [0, 0], sizes = [8, 128], strides = [1, 1]} : vector<8x512xf32> to vector<8x128xf32>
    %21 = vector.extract_strided_slice %19 {offsets = [0, 128], sizes = [8, 128], strides = [1, 1]} : vector<8x512xf32> to vector<8x128xf32>
    %22 = vector.extract_strided_slice %19 {offsets = [0, 256], sizes = [8, 128], strides = [1, 1]} : vector<8x512xf32> to vector<8x128xf32>
    %23 = vector.extract_strided_slice %19 {offsets = [0, 384], sizes = [8, 128], strides = [1, 1]} : vector<8x512xf32> to vector<8x128xf32>
    %24 = arith.negf %21 : vector<8x128xf32>
    %25 = math.exp %24 : vector<8x128xf32>
    %cst_18 = arith.constant 1.000000e+00 : f32
    %26 = vector.broadcast %cst_18 : f32 to vector<8x128xf32>
    %27 = arith.addf %26, %25 : vector<8x128xf32>
    %28 = arith.divf %26, %27 : vector<8x128xf32>
    %29 = arith.mulf %13, %28 : vector<8x128xf32>
    %30 = arith.negf %20 : vector<8x128xf32>
    %31 = math.exp %30 : vector<8x128xf32>
    %cst_19 = arith.constant 1.000000e+00 : f32
    %32 = vector.broadcast %cst_19 : f32 to vector<8x128xf32>
    %33 = arith.addf %32, %31 : vector<8x128xf32>
    %34 = arith.divf %32, %33 : vector<8x128xf32>
    %35 = math.tanh %22 : vector<8x128xf32>
    %36 = arith.mulf %34, %35 : vector<8x128xf32>
    %37 = arith.addf %29, %36 : vector<8x128xf32>
    %38 = math.tanh %37 : vector<8x128xf32>
    %39 = arith.negf %23 : vector<8x128xf32>
    %40 = math.exp %39 : vector<8x128xf32>
    %cst_20 = arith.constant 1.000000e+00 : f32
    %41 = vector.broadcast %cst_20 : f32 to vector<8x128xf32>
    %42 = arith.addf %41, %40 : vector<8x128xf32>
    %43 = arith.divf %41, %42 : vector<8x128xf32>
    %44 = arith.mulf %38, %43 : vector<8x128xf32>
    %c1_i32 = arith.constant 1 : i32
    %c8_i32_21 = arith.constant 8 : i32
    %45 = arith.muli %c1_i32, %c8_i32_21 : i32
    %46 = tpu.assume_multiple %45, 8 : i32
    %47 = arith.index_cast %46 : i32 to index
    %c0_22 = arith.constant 0 : index
    %48 = vector.load %arg8[%47, %c0_22] : memref<64x512xf32, #tpu.memory_space<vmem>>, vector<8x512xf32>
    %cst_23 = arith.constant dense<0.000000e+00> : vector<8x512xf32>
    %49 = tpu.matmul %44, %11, %cst_23 {dimension_numbers = #tpu.dot_dimension_numbers<[1], [0], [0], [1], [0, 0, 1, 1], [], []>} : vector<8x128xf32>, vector<128x512xf32>, vector<8x512xf32> -> vector<8x512xf32>
    %50 = arith.addf %48, %49 : vector<8x512xf32>
    %51 = vector.extract_strided_slice %50 {offsets = [0, 0], sizes = [8, 128], strides = [1, 1]} : vector<8x512xf32> to vector<8x128xf32>
    %52 = vector.extract_strided_slice %50 {offsets = [0, 128], sizes = [8, 128], strides = [1, 1]} : vector<8x512xf32> to vector<8x128xf32>
    %53 = vector.extract_strided_slice %50 {offsets = [0, 256], sizes = [8, 128], strides = [1, 1]} : vector<8x512xf32> to vector<8x128xf32>
    %54 = vector.extract_strided_slice %50 {offsets = [0, 384], sizes = [8, 128], strides = [1, 1]} : vector<8x512xf32> to vector<8x128xf32>
    %55 = arith.negf %52 : vector<8x128xf32>
    %56 = math.exp %55 : vector<8x128xf32>
    %cst_24 = arith.constant 1.000000e+00 : f32
    %57 = vector.broadcast %cst_24 : f32 to vector<8x128xf32>
    %58 = arith.addf %57, %56 : vector<8x128xf32>
    %59 = arith.divf %57, %58 : vector<8x128xf32>
    %60 = arith.mulf %37, %59 : vector<8x128xf32>
    %61 = arith.negf %51 : vector<8x128xf32>
    %62 = math.exp %61 : vector<8x128xf32>
    %cst_25 = arith.constant 1.000000e+00 : f32
    %63 = vector.broadcast %cst_25 : f32 to vector<8x128xf32>
    %64 = arith.addf %63, %62 : vector<8x128xf32>
    %65 = arith.divf %63, %64 : vector<8x128xf32>
    %66 = math.tanh %53 : vector<8x128xf32>
    %67 = arith.mulf %65, %66 : vector<8x128xf32>
    %68 = arith.addf %60, %67 : vector<8x128xf32>
    %69 = math.tanh %68 : vector<8x128xf32>
    %70 = arith.negf %54 : vector<8x128xf32>
    %71 = math.exp %70 : vector<8x128xf32>
    %cst_26 = arith.constant 1.000000e+00 : f32
    %72 = vector.broadcast %cst_26 : f32 to vector<8x128xf32>
    %73 = arith.addf %72, %71 : vector<8x128xf32>
    %74 = arith.divf %72, %73 : vector<8x128xf32>
    %75 = arith.mulf %69, %74 : vector<8x128xf32>
    %c2_i32 = arith.constant 2 : i32
    %c8_i32_27 = arith.constant 8 : i32
    %76 = arith.muli %c2_i32, %c8_i32_27 : i32
    %77 = tpu.assume_multiple %76, 8 : i32
    %78 = arith.index_cast %77 : i32 to index
    %c0_28 = arith.constant 0 : index
    %79 = vector.load %arg8[%78, %c0_28] : memref<64x512xf32, #tpu.memory_space<vmem>>, vector<8x512xf32>
    %cst_29 = arith.constant dense<0.000000e+00> : vector<8x512xf32>
    %80 = tpu.matmul %75, %11, %cst_29 {dimension_numbers = #tpu.dot_dimension_numbers<[1], [0], [0], [1], [0, 0, 1, 1], [], []>} : vector<8x128xf32>, vector<128x512xf32>, vector<8x512xf32> -> vector<8x512xf32>
    %81 = arith.addf %79, %80 : vector<8x512xf32>
    %82 = vector.extract_strided_slice %81 {offsets = [0, 0], sizes = [8, 128], strides = [1, 1]} : vector<8x512xf32> to vector<8x128xf32>
    %83 = vector.extract_strided_slice %81 {offsets = [0, 128], sizes = [8, 128], strides = [1, 1]} : vector<8x512xf32> to vector<8x128xf32>
    %84 = vector.extract_strided_slice %81 {offsets = [0, 256], sizes = [8, 128], strides = [1, 1]} : vector<8x512xf32> to vector<8x128xf32>
    %85 = vector.extract_strided_slice %81 {offsets = [0, 384], sizes = [8, 128], strides = [1, 1]} : vector<8x512xf32> to vector<8x128xf32>
    %86 = arith.negf %83 : vector<8x128xf32>
    %87 = math.exp %86 : vector<8x128xf32>
    %cst_30 = arith.constant 1.000000e+00 : f32
    %88 = vector.broadcast %cst_30 : f32 to vector<8x128xf32>
    %89 = arith.addf %88, %87 : vector<8x128xf32>
    %90 = arith.divf %88, %89 : vector<8x128xf32>
    %91 = arith.mulf %68, %90 : vector<8x128xf32>
    %92 = arith.negf %82 : vector<8x128xf32>
    %93 = math.exp %92 : vector<8x128xf32>
    %cst_31 = arith.constant 1.000000e+00 : f32
    %94 = vector.broadcast %cst_31 : f32 to vector<8x128xf32>
    %95 = arith.addf %94, %93 : vector<8x128xf32>
    %96 = arith.divf %94, %95 : vector<8x128xf32>
    %97 = math.tanh %84 : vector<8x128xf32>
    %98 = arith.mulf %96, %97 : vector<8x128xf32>
    %99 = arith.addf %91, %98 : vector<8x128xf32>
    %100 = math.tanh %99 : vector<8x128xf32>
    %101 = arith.negf %85 : vector<8x128xf32>
    %102 = math.exp %101 : vector<8x128xf32>
    %cst_32 = arith.constant 1.000000e+00 : f32
    %103 = vector.broadcast %cst_32 : f32 to vector<8x128xf32>
    %104 = arith.addf %103, %102 : vector<8x128xf32>
    %105 = arith.divf %103, %104 : vector<8x128xf32>
    %106 = arith.mulf %100, %105 : vector<8x128xf32>
    %c3_i32 = arith.constant 3 : i32
    %c8_i32_33 = arith.constant 8 : i32
    %107 = arith.muli %c3_i32, %c8_i32_33 : i32
    %108 = tpu.assume_multiple %107, 8 : i32
    %109 = arith.index_cast %108 : i32 to index
    %c0_34 = arith.constant 0 : index
    %110 = vector.load %arg8[%109, %c0_34] : memref<64x512xf32, #tpu.memory_space<vmem>>, vector<8x512xf32>
    %cst_35 = arith.constant dense<0.000000e+00> : vector<8x512xf32>
    %111 = tpu.matmul %106, %11, %cst_35 {dimension_numbers = #tpu.dot_dimension_numbers<[1], [0], [0], [1], [0, 0, 1, 1], [], []>} : vector<8x128xf32>, vector<128x512xf32>, vector<8x512xf32> -> vector<8x512xf32>
    %112 = arith.addf %110, %111 : vector<8x512xf32>
    %113 = vector.extract_strided_slice %112 {offsets = [0, 0], sizes = [8, 128], strides = [1, 1]} : vector<8x512xf32> to vector<8x128xf32>
    %114 = vector.extract_strided_slice %112 {offsets = [0, 128], sizes = [8, 128], strides = [1, 1]} : vector<8x512xf32> to vector<8x128xf32>
    %115 = vector.extract_strided_slice %112 {offsets = [0, 256], sizes = [8, 128], strides = [1, 1]} : vector<8x512xf32> to vector<8x128xf32>
    %116 = vector.extract_strided_slice %112 {offsets = [0, 384], sizes = [8, 128], strides = [1, 1]} : vector<8x512xf32> to vector<8x128xf32>
    %117 = arith.negf %114 : vector<8x128xf32>
    %118 = math.exp %117 : vector<8x128xf32>
    %cst_36 = arith.constant 1.000000e+00 : f32
    %119 = vector.broadcast %cst_36 : f32 to vector<8x128xf32>
    %120 = arith.addf %119, %118 : vector<8x128xf32>
    %121 = arith.divf %119, %120 : vector<8x128xf32>
    %122 = arith.mulf %99, %121 : vector<8x128xf32>
    %123 = arith.negf %113 : vector<8x128xf32>
    %124 = math.exp %123 : vector<8x128xf32>
    %cst_37 = arith.constant 1.000000e+00 : f32
    %125 = vector.broadcast %cst_37 : f32 to vector<8x128xf32>
    %126 = arith.addf %125, %124 : vector<8x128xf32>
    %127 = arith.divf %125, %126 : vector<8x128xf32>
    %128 = math.tanh %115 : vector<8x128xf32>
    %129 = arith.mulf %127, %128 : vector<8x128xf32>
    %130 = arith.addf %122, %129 : vector<8x128xf32>
    %131 = math.tanh %130 : vector<8x128xf32>
    %132 = arith.negf %116 : vector<8x128xf32>
    %133 = math.exp %132 : vector<8x128xf32>
    %cst_38 = arith.constant 1.000000e+00 : f32
    %134 = vector.broadcast %cst_38 : f32 to vector<8x128xf32>
    %135 = arith.addf %134, %133 : vector<8x128xf32>
    %136 = arith.divf %134, %135 : vector<8x128xf32>
    %137 = arith.mulf %131, %136 : vector<8x128xf32>
    %c4_i32 = arith.constant 4 : i32
    %c8_i32_39 = arith.constant 8 : i32
    %138 = arith.muli %c4_i32, %c8_i32_39 : i32
    %139 = tpu.assume_multiple %138, 8 : i32
    %140 = arith.index_cast %139 : i32 to index
    %c0_40 = arith.constant 0 : index
    %141 = vector.load %arg8[%140, %c0_40] : memref<64x512xf32, #tpu.memory_space<vmem>>, vector<8x512xf32>
    %cst_41 = arith.constant dense<0.000000e+00> : vector<8x512xf32>
    %142 = tpu.matmul %137, %11, %cst_41 {dimension_numbers = #tpu.dot_dimension_numbers<[1], [0], [0], [1], [0, 0, 1, 1], [], []>} : vector<8x128xf32>, vector<128x512xf32>, vector<8x512xf32> -> vector<8x512xf32>
    %143 = arith.addf %141, %142 : vector<8x512xf32>
    %144 = vector.extract_strided_slice %143 {offsets = [0, 0], sizes = [8, 128], strides = [1, 1]} : vector<8x512xf32> to vector<8x128xf32>
    %145 = vector.extract_strided_slice %143 {offsets = [0, 128], sizes = [8, 128], strides = [1, 1]} : vector<8x512xf32> to vector<8x128xf32>
    %146 = vector.extract_strided_slice %143 {offsets = [0, 256], sizes = [8, 128], strides = [1, 1]} : vector<8x512xf32> to vector<8x128xf32>
    %147 = vector.extract_strided_slice %143 {offsets = [0, 384], sizes = [8, 128], strides = [1, 1]} : vector<8x512xf32> to vector<8x128xf32>
    %148 = arith.negf %145 : vector<8x128xf32>
    %149 = math.exp %148 : vector<8x128xf32>
    %cst_42 = arith.constant 1.000000e+00 : f32
    %150 = vector.broadcast %cst_42 : f32 to vector<8x128xf32>
    %151 = arith.addf %150, %149 : vector<8x128xf32>
    %152 = arith.divf %150, %151 : vector<8x128xf32>
    %153 = arith.mulf %130, %152 : vector<8x128xf32>
    %154 = arith.negf %144 : vector<8x128xf32>
    %155 = math.exp %154 : vector<8x128xf32>
    %cst_43 = arith.constant 1.000000e+00 : f32
    %156 = vector.broadcast %cst_43 : f32 to vector<8x128xf32>
    %157 = arith.addf %156, %155 : vector<8x128xf32>
    %158 = arith.divf %156, %157 : vector<8x128xf32>
    %159 = math.tanh %146 : vector<8x128xf32>
    %160 = arith.mulf %158, %159 : vector<8x128xf32>
    %161 = arith.addf %153, %160 : vector<8x128xf32>
    %162 = math.tanh %161 : vector<8x128xf32>
    %163 = arith.negf %147 : vector<8x128xf32>
    %164 = math.exp %163 : vector<8x128xf32>
    %cst_44 = arith.constant 1.000000e+00 : f32
    %165 = vector.broadcast %cst_44 : f32 to vector<8x128xf32>
    %166 = arith.addf %165, %164 : vector<8x128xf32>
    %167 = arith.divf %165, %166 : vector<8x128xf32>
    %168 = arith.mulf %162, %167 : vector<8x128xf32>
    %c5_i32 = arith.constant 5 : i32
    %c8_i32_45 = arith.constant 8 : i32
    %169 = arith.muli %c5_i32, %c8_i32_45 : i32
    %170 = tpu.assume_multiple %169, 8 : i32
    %171 = arith.index_cast %170 : i32 to index
    %c0_46 = arith.constant 0 : index
    %172 = vector.load %arg8[%171, %c0_46] : memref<64x512xf32, #tpu.memory_space<vmem>>, vector<8x512xf32>
    %cst_47 = arith.constant dense<0.000000e+00> : vector<8x512xf32>
    %173 = tpu.matmul %168, %11, %cst_47 {dimension_numbers = #tpu.dot_dimension_numbers<[1], [0], [0], [1], [0, 0, 1, 1], [], []>} : vector<8x128xf32>, vector<128x512xf32>, vector<8x512xf32> -> vector<8x512xf32>
    %174 = arith.addf %172, %173 : vector<8x512xf32>
    %175 = vector.extract_strided_slice %174 {offsets = [0, 0], sizes = [8, 128], strides = [1, 1]} : vector<8x512xf32> to vector<8x128xf32>
    %176 = vector.extract_strided_slice %174 {offsets = [0, 128], sizes = [8, 128], strides = [1, 1]} : vector<8x512xf32> to vector<8x128xf32>
    %177 = vector.extract_strided_slice %174 {offsets = [0, 256], sizes = [8, 128], strides = [1, 1]} : vector<8x512xf32> to vector<8x128xf32>
    %178 = vector.extract_strided_slice %174 {offsets = [0, 384], sizes = [8, 128], strides = [1, 1]} : vector<8x512xf32> to vector<8x128xf32>
    %179 = arith.negf %176 : vector<8x128xf32>
    %180 = math.exp %179 : vector<8x128xf32>
    %cst_48 = arith.constant 1.000000e+00 : f32
    %181 = vector.broadcast %cst_48 : f32 to vector<8x128xf32>
    %182 = arith.addf %181, %180 : vector<8x128xf32>
    %183 = arith.divf %181, %182 : vector<8x128xf32>
    %184 = arith.mulf %161, %183 : vector<8x128xf32>
    %185 = arith.negf %175 : vector<8x128xf32>
    %186 = math.exp %185 : vector<8x128xf32>
    %cst_49 = arith.constant 1.000000e+00 : f32
    %187 = vector.broadcast %cst_49 : f32 to vector<8x128xf32>
    %188 = arith.addf %187, %186 : vector<8x128xf32>
    %189 = arith.divf %187, %188 : vector<8x128xf32>
    %190 = math.tanh %177 : vector<8x128xf32>
    %191 = arith.mulf %189, %190 : vector<8x128xf32>
    %192 = arith.addf %184, %191 : vector<8x128xf32>
    %193 = math.tanh %192 : vector<8x128xf32>
    %194 = arith.negf %178 : vector<8x128xf32>
    %195 = math.exp %194 : vector<8x128xf32>
    %cst_50 = arith.constant 1.000000e+00 : f32
    %196 = vector.broadcast %cst_50 : f32 to vector<8x128xf32>
    %197 = arith.addf %196, %195 : vector<8x128xf32>
    %198 = arith.divf %196, %197 : vector<8x128xf32>
    %199 = arith.mulf %193, %198 : vector<8x128xf32>
    %c6_i32 = arith.constant 6 : i32
    %c8_i32_51 = arith.constant 8 : i32
    %200 = arith.muli %c6_i32, %c8_i32_51 : i32
    %201 = tpu.assume_multiple %200, 8 : i32
    %202 = arith.index_cast %201 : i32 to index
    %c0_52 = arith.constant 0 : index
    %203 = vector.load %arg8[%202, %c0_52] : memref<64x512xf32, #tpu.memory_space<vmem>>, vector<8x512xf32>
    %cst_53 = arith.constant dense<0.000000e+00> : vector<8x512xf32>
    %204 = tpu.matmul %199, %11, %cst_53 {dimension_numbers = #tpu.dot_dimension_numbers<[1], [0], [0], [1], [0, 0, 1, 1], [], []>} : vector<8x128xf32>, vector<128x512xf32>, vector<8x512xf32> -> vector<8x512xf32>
    %205 = arith.addf %203, %204 : vector<8x512xf32>
    %206 = vector.extract_strided_slice %205 {offsets = [0, 0], sizes = [8, 128], strides = [1, 1]} : vector<8x512xf32> to vector<8x128xf32>
    %207 = vector.extract_strided_slice %205 {offsets = [0, 128], sizes = [8, 128], strides = [1, 1]} : vector<8x512xf32> to vector<8x128xf32>
    %208 = vector.extract_strided_slice %205 {offsets = [0, 256], sizes = [8, 128], strides = [1, 1]} : vector<8x512xf32> to vector<8x128xf32>
    %209 = vector.extract_strided_slice %205 {offsets = [0, 384], sizes = [8, 128], strides = [1, 1]} : vector<8x512xf32> to vector<8x128xf32>
    %210 = arith.negf %207 : vector<8x128xf32>
    %211 = math.exp %210 : vector<8x128xf32>
    %cst_54 = arith.constant 1.000000e+00 : f32
    %212 = vector.broadcast %cst_54 : f32 to vector<8x128xf32>
    %213 = arith.addf %212, %211 : vector<8x128xf32>
    %214 = arith.divf %212, %213 : vector<8x128xf32>
    %215 = arith.mulf %192, %214 : vector<8x128xf32>
    %216 = arith.negf %206 : vector<8x128xf32>
    %217 = math.exp %216 : vector<8x128xf32>
    %cst_55 = arith.constant 1.000000e+00 : f32
    %218 = vector.broadcast %cst_55 : f32 to vector<8x128xf32>
    %219 = arith.addf %218, %217 : vector<8x128xf32>
    %220 = arith.divf %218, %219 : vector<8x128xf32>
    %221 = math.tanh %208 : vector<8x128xf32>
    %222 = arith.mulf %220, %221 : vector<8x128xf32>
    %223 = arith.addf %215, %222 : vector<8x128xf32>
    %224 = math.tanh %223 : vector<8x128xf32>
    %225 = arith.negf %209 : vector<8x128xf32>
    %226 = math.exp %225 : vector<8x128xf32>
    %cst_56 = arith.constant 1.000000e+00 : f32
    %227 = vector.broadcast %cst_56 : f32 to vector<8x128xf32>
    %228 = arith.addf %227, %226 : vector<8x128xf32>
    %229 = arith.divf %227, %228 : vector<8x128xf32>
    %230 = arith.mulf %224, %229 : vector<8x128xf32>
    %c7_i32 = arith.constant 7 : i32
    %c8_i32_57 = arith.constant 8 : i32
    %231 = arith.muli %c7_i32, %c8_i32_57 : i32
    %232 = tpu.assume_multiple %231, 8 : i32
    %233 = arith.index_cast %232 : i32 to index
    %c0_58 = arith.constant 0 : index
    %234 = vector.load %arg8[%233, %c0_58] : memref<64x512xf32, #tpu.memory_space<vmem>>, vector<8x512xf32>
    %cst_59 = arith.constant dense<0.000000e+00> : vector<8x512xf32>
    %235 = tpu.matmul %230, %11, %cst_59 {dimension_numbers = #tpu.dot_dimension_numbers<[1], [0], [0], [1], [0, 0, 1, 1], [], []>} : vector<8x128xf32>, vector<128x512xf32>, vector<8x512xf32> -> vector<8x512xf32>
    %236 = arith.addf %234, %235 : vector<8x512xf32>
    %237 = vector.extract_strided_slice %236 {offsets = [0, 0], sizes = [8, 128], strides = [1, 1]} : vector<8x512xf32> to vector<8x128xf32>
    %238 = vector.extract_strided_slice %236 {offsets = [0, 128], sizes = [8, 128], strides = [1, 1]} : vector<8x512xf32> to vector<8x128xf32>
    %239 = vector.extract_strided_slice %236 {offsets = [0, 256], sizes = [8, 128], strides = [1, 1]} : vector<8x512xf32> to vector<8x128xf32>
    %240 = vector.extract_strided_slice %236 {offsets = [0, 384], sizes = [8, 128], strides = [1, 1]} : vector<8x512xf32> to vector<8x128xf32>
    %241 = arith.negf %238 : vector<8x128xf32>
    %242 = math.exp %241 : vector<8x128xf32>
    %cst_60 = arith.constant 1.000000e+00 : f32
    %243 = vector.broadcast %cst_60 : f32 to vector<8x128xf32>
    %244 = arith.addf %243, %242 : vector<8x128xf32>
    %245 = arith.divf %243, %244 : vector<8x128xf32>
    %246 = arith.mulf %223, %245 : vector<8x128xf32>
    %247 = arith.negf %237 : vector<8x128xf32>
    %248 = math.exp %247 : vector<8x128xf32>
    %cst_61 = arith.constant 1.000000e+00 : f32
    %249 = vector.broadcast %cst_61 : f32 to vector<8x128xf32>
    %250 = arith.addf %249, %248 : vector<8x128xf32>
    %251 = arith.divf %249, %250 : vector<8x128xf32>
    %252 = math.tanh %239 : vector<8x128xf32>
    %253 = arith.mulf %251, %252 : vector<8x128xf32>
    %254 = arith.addf %246, %253 : vector<8x128xf32>
    %255 = math.tanh %254 : vector<8x128xf32>
    %256 = arith.negf %240 : vector<8x128xf32>
    %257 = math.exp %256 : vector<8x128xf32>
    %cst_62 = arith.constant 1.000000e+00 : f32
    %258 = vector.broadcast %cst_62 : f32 to vector<8x128xf32>
    %259 = arith.addf %258, %257 : vector<8x128xf32>
    %260 = arith.divf %258, %259 : vector<8x128xf32>
    %261 = arith.mulf %255, %260 : vector<8x128xf32>
    %c8_i32_63 = arith.constant 8 : i32
    %c0_64 = arith.constant 0 : index
    %c0_65 = arith.constant 0 : index
    %262 = vector.load %arg9[%c0_64, %c0_65] : memref<8x128xf32, #tpu.memory_space<vmem>>, vector<8x128xf32>
    tpu.vector_store %arg9[%c0_64, %c0_65], %261 {strides = array<i32>} : memref<8x128xf32, #tpu.memory_space<vmem>>, vector<8x128xf32>,
    %c0_66 = arith.constant 0 : index
    %c0_67 = arith.constant 0 : index
    %263 = vector.load %arg10[%c0_66, %c0_67] : memref<8x128xf32, #tpu.memory_space<vmem>>, vector<8x128xf32>
    tpu.vector_store %arg10[%c0_66, %c0_67], %254 {strides = array<i32>} : memref<8x128xf32, #tpu.memory_space<vmem>>, vector<8x128xf32>,
    %c0_i32_68 = arith.constant 0 : i32
    %264 = arith.cmpi eq, %arg1, %c0_i32_68 : i32
    %265 = arith.extui %264 : i1 to i32
    %c0_i32_69 = arith.constant 0 : i32
    %266 = arith.cmpi ne, %265, %c0_i32_69 : i32
    scf.if %266 {
      %c0_70 = arith.constant 0 : index
      %c0_71 = arith.constant 0 : index
      %267 = vector.load %arg6[%c0_70, %c0_71] : memref<8x128xf32, #tpu.memory_space<vmem>>, vector<8x128xf32>
      tpu.vector_store %arg6[%c0_70, %c0_71], %261 {strides = array<i32>} : memref<8x128xf32, #tpu.memory_space<vmem>>, vector<8x128xf32>,
      %c0_72 = arith.constant 0 : index
      %c0_73 = arith.constant 0 : index
      %268 = vector.load %arg7[%c0_72, %c0_73] : memref<8x128xf32, #tpu.memory_space<vmem>>, vector<8x128xf32>
      tpu.vector_store %arg7[%c0_72, %c0_73], %254 {strides = array<i32>} : memref<8x128xf32, #tpu.memory_space<vmem>>, vector<8x128xf32>,
    } else {
    }
    return
  }
  func.func @transform_0(%arg0: i32, %arg1: i32) -> (i32, i32, i32) {
    %c0_i32 = arith.constant 0 : i32
    %c0_i32_0 = arith.constant 0 : i32
    return %arg1, %arg0, %c0_i32 : i32, i32, i32
  }
  func.func @transform_1(%arg0: i32, %arg1: i32) -> (i32, i32) {
    %c0_i32 = arith.constant 0 : i32
    %c0_i32_0 = arith.constant 0 : i32
    %c0_i32_1 = arith.constant 0 : i32
    return %c0_i32, %c0_i32_0 : i32, i32
  }
  func.func @transform_2(%arg0: i32, %arg1: i32) -> (i32, i32) {
    %c0_i32 = arith.constant 0 : i32
    %c0_i32_0 = arith.constant 0 : i32
    %c0_i32_1 = arith.constant 0 : i32
    return %c0_i32, %c0_i32_0 : i32, i32
  }
  func.func @transform_3(%arg0: i32, %arg1: i32) -> (i32, i32) {
    %c0_i32 = arith.constant 0 : i32
    %c0_i32_0 = arith.constant 0 : i32
    %c0_i32_1 = arith.constant 0 : i32
    return %c0_i32, %c0_i32_0 : i32, i32
  }
  func.func @transform_4(%arg0: i32, %arg1: i32) -> (i32, i32) {
    %c0_i32 = arith.constant 0 : i32
    %c0_i32_0 = arith.constant 0 : i32
    return %arg0, %c0_i32 : i32, i32
  }
  func.func @transform_5(%arg0: i32, %arg1: i32) -> (i32, i32) {
    %c0_i32 = arith.constant 0 : i32
    %c0_i32_0 = arith.constant 0 : i32
    return %arg0, %c0_i32 : i32, i32
  }
}

</mosaic_0001>

<llo_original>
// kernel: tpu_custom_call.1
$region0: #{tpu_custom_call.1}
  #allocation0 [shape = 'u32[]', space=smem, size = 0x4, offset = 0x4, fixed_abs, tag = 'smem constant byte address 0x4 - core index']
  #allocation1 [shape = 'u32[144,128]{1,0:T(1,128)}', space=vmem, size = 0x12000, scoped, tag = 'internal scratch']
  %s0 = inlined_call_operand.hbm [shape: f32[8,128], index: 0, kind: input, shape index: {}]
  %s1 = inlined_call_operand.hbm [shape: f32[8,128], index: 1, kind: output, shape index: {}]
  %s2 = sld [smem:[#allocation0]]
  $region18: #{tpu_custom_call.1} parent=0
    _
  %s4 = ssub.s32 1, %s2
  %s5 = scalar_select 0, %s4, %s2
  $region1: #{tpu_custom_call.1} parent=0
    #allocation2 [shape = 'u8[4096]{0}', space=vmem, size = 0x1000, scoped, tag = 'input window, operand 0, single buffered']
    #allocation3 [shape = 's32[1]{0}', space=sflag, size = 0x4, scoped, tag = 'scoped memory for tpu_custom_call.1']
    #allocation4 [shape = 's32[1]{0}', space=sflag, size = 0x4, scoped, tag = 'scoped memory for tpu_custom_call.1']
    #allocation5 [shape = 'u8[4096]{0}', space=vmem, size = 0x1000, scoped, tag = 'output window, operand 0, single buffered']
    %6 = vsyncpa [#allocation3], 0
    %7 = vsyncpa [#allocation4], 0
    // Predicated region
    $region2: #{tpu_custom_call.1} parent=1 // pred_check
      _
    $region3: #{tpu_custom_call.1} parent=1 // pred_check_branch
      %9 = sbr.rel (0) target = $region5
    $region4: #{tpu_custom_call.1} parent=1 // pred_region
      %s11 = ssub.s32 128, 128
      %12 = vsyncadd [#allocation3], %s11
      %s14 = sshll.u32 [#allocation2], 4
      %s15 = int_to_ptr.vmem [resolvable:$true] %s14
      %17 = dma.hbm_to_vmem [thread:$0]  %s0, 128, %s15, [#allocation3]
    $region5: #{tpu_custom_call.1} parent=1 // pred_fallthru
      _
    // Predicated region
    $region6: #{tpu_custom_call.1} parent=1 // pred_check
      _
    $region7: #{tpu_custom_call.1} parent=1 // pred_check_branch
      %19 = sbr.rel (0) target = $region9
    $region8: #{tpu_custom_call.1} parent=1 // pred_region
      %20 = dma.done [#allocation3], 128
    $region9: #{tpu_custom_call.1} parent=1 // pred_fallthru
      _
    %v21 = vld [vmem:[#allocation2] sm:$0xff]
    %v22 = vadd.f32 %v21, 1.0
    %23 = vst [vmem:[#allocation5] sm:$0xff] %v22
    // Predicated region
    $region10: #{tpu_custom_call.1} parent=1 // pred_check
      _
    $region11: #{tpu_custom_call.1} parent=1 // pred_check_branch
      %25 = sbr.rel (0) target = $region13
    $region12: #{tpu_custom_call.1} parent=1 // pred_region
      %s27 = ssub.s32 128, 128
      %28 = vsyncadd [#allocation4], %s27
      %s30 = sshll.u32 [#allocation5], 4
      %s31 = int_to_ptr.vmem [resolvable:$true] %s30
      %33 = dma.vmem_to_hbm [thread:$0]  %s31, 128, %s1, [#allocation4]
    $region13: #{tpu_custom_call.1} parent=1 // pred_fallthru
      _
    // Predicated region
    $region14: #{tpu_custom_call.1} parent=1 // pred_check
      _
    $region15: #{tpu_custom_call.1} parent=1 // pred_check_branch
      %35 = sbr.rel (0) target = $region17
    $region16: #{tpu_custom_call.1} parent=1 // pred_region
      %36 = dma.done [#allocation4], 128
    $region17: #{tpu_custom_call.1} parent=1 // pred_fallthru
      _
    %37 = vsyncpa [#allocation3], 1
    %38 = vsyncpa [#allocation4], 1

// kernel: tpu_custom_call.1
$region0: #{tpu_custom_call.1}
  #allocation0 [shape = 'u32[]', space=smem, size = 0x4, offset = 0x4, fixed_abs, tag = 'smem constant byte address 0x4 - core index']
  #allocation1 [shape = 'u32[144,128]{1,0:T(1,128)}', space=vmem, size = 0x12000, scoped, tag = 'internal scratch']
  #allocation2 [shape = 'f32[64,512]{1,0:T(8,128)}', space=vmem, size = 0x20000, scoped, tag = 'scratch operand']
  #allocation3 [shape = 'f32[8,128]{1,0:T(8,128)}', space=vmem, size = 0x1000, scoped, tag = 'scratch operand']
  #allocation4 [shape = 'f32[8,128]{1,0:T(8,128)}', space=vmem, size = 0x1000, scoped, tag = 'scratch operand']
  %s0 = inlined_call_operand.hbm [shape: f32[8,8,16], index: 0, kind: input, shape index: {}]
  %s1 = inlined_call_operand.hbm [shape: f32[16,512], index: 1, kind: input, shape index: {}]
  %s2 = inlined_call_operand.hbm [shape: f32[128,512], index: 2, kind: input, shape index: {}]
  %s3 = inlined_call_operand.vmem [shape: f32[1,512], index: 3, kind: input, shape index: {}]
  %s4 = inlined_call_operand.hbm [shape: f32[8,128], index: 4, kind: output, shape index: {0}]
  %s5 = inlined_call_operand.hbm [shape: f32[8,128], index: 5, kind: output, shape index: {1}]
  %6 = xla_tuple %s4, %s5
  %s7 = sld [smem:[#allocation0]]
  $region54: #{tpu_custom_call.1} parent=0
    _
  %s9 = ssub.s32 1, %s7
  %s10 = scalar_select 0, %s9, %s7
  $region1: #{tpu_custom_call.1} parent=0
    #allocation5 [shape = 'u8[32768]{0}', space=vmem, size = 0x8000, scoped, tag = 'input window, operand 0, single buffered']
    #allocation6 [shape = 's32[1]{0}', space=sflag, size = 0x4, scoped, tag = 'scoped memory for tpu_custom_call.1']
    #allocation7 [shape = 's32[1]{0}', space=sflag, size = 0x4, scoped, tag = 'scoped memory for tpu_custom_call.1']
    #allocation8 [shape = 'u8[32768]{0}', space=vmem, size = 0x8000, scoped, tag = 'input window, operand 1, single buffered']
    #allocation9 [shape = 's32[1]{0}', space=sflag, size = 0x4, scoped, tag = 'scoped memory for tpu_custom_call.1']
    #allocation10 [shape = 'u8[262144]{0}', space=vmem, size = 0x40000, scoped, tag = 'input window, operand 2, single buffered']
    #allocation11 [shape = 'u8[4096]{0}', space=vmem, size = 0x1000, scoped, tag = 'output window, operand 0, single buffered']
    #allocation12 [shape = 'u8[4096]{0}', space=vmem, size = 0x1000, scoped, tag = 'output window, operand 1, single buffered']
    #allocation13 [shape = 's32[1]{0}', space=sflag, size = 0x4, scoped, tag = 'scoped memory for tpu_custom_call.1']
    %11 = vsyncpa [#allocation6], 0
    %12 = vsyncpa [#allocation9], 0
    %13 = vsyncpa [#allocation7], 0
    %14 = vsyncpa [#allocation13], 0
    // Predicated region
    $region2: #{tpu_custom_call.1} parent=1 // pred_check
      _
    $region3: #{tpu_custom_call.1} parent=1 // pred_check_branch
      %16 = sbr.rel (0) target = $region5
    $region4: #{tpu_custom_call.1} parent=1 // pred_region
      %s18 = ssub.s32 1024, 1024
      %19 = vsyncadd [#allocation6], %s18
      %s20 = sshll.u32 [#allocation5], 4
      %s21 = int_to_ptr.vmem [resolvable:$true] %s20
      %26 = dma.hbm_to_vmem [thread:$0]  %s0, 1024, %s21, [#allocation6], 128, 128, 8
    $region5: #{tpu_custom_call.1} parent=1 // pred_fallthru
      _
    // Predicated region
    $region6: #{tpu_custom_call.1} parent=1 // pred_check
      _
    $region7: #{tpu_custom_call.1} parent=1 // pred_check_branch
      %28 = sbr.rel (0) target = $region9
    $region8: #{tpu_custom_call.1} parent=1 // pred_region
      %s30 = ssub.s32 1024, 1024
      %31 = vsyncadd [#allocation9], %s30
      %s32 = sshll.u32 [#allocation8], 4
      %s33 = int_to_ptr.vmem [resolvable:$true] %s32
      %38 = dma.hbm_to_vmem [thread:$0]  %s1, 1024, %s33, [#allocation9], 512, 512, 32
    $region9: #{tpu_custom_call.1} parent=1 // pred_fallthru
      _
    // Predicated region
    $region10: #{tpu_custom_call.1} parent=1 // pred_check
      _
    $region11: #{tpu_custom_call.1} parent=1 // pred_check_branch
      %40 = sbr.rel (0) target = $region13
    $region12: #{tpu_custom_call.1} parent=1 // pred_region
      %s42 = ssub.s32 8192, 8192
      %43 = vsyncadd [#allocation9], %s42
      %s44 = sshll.u32 [#allocation10], 4
      %s45 = int_to_ptr.vmem [resolvable:$true] %s44
      %50 = dma.hbm_to_vmem [thread:$0]  %s2, 8192, %s45, [#allocation9], 512, 512, 32
    $region13: #{tpu_custom_call.1} parent=1 // pred_fallthru
      _
    // Predicated region
    $region14: #{tpu_custom_call.1} parent=1 // pred_check
      _
    $region15: #{tpu_custom_call.1} parent=1 // pred_check_branch
      %52 = sbr.rel (0) target = $region17
    $region16: #{tpu_custom_call.1} parent=1 // pred_region
      _
    $region17: #{tpu_custom_call.1} parent=1 // pred_fallthru
      _
    // Predicated region
    $region18: #{tpu_custom_call.1} parent=1 // pred_check
      _
    $region19: #{tpu_custom_call.1} parent=1 // pred_check_branch
      %54 = sbr.rel (0) target = $region21
    $region20: #{tpu_custom_call.1} parent=1 // pred_region
      %55 = dma.done [#allocation6], 1024
    $region21: #{tpu_custom_call.1} parent=1 // pred_fallthru
      _
    // Predicated region
    $region22: #{tpu_custom_call.1} parent=1 // pred_check
      _
    $region23: #{tpu_custom_call.1} parent=1 // pred_check_branch
      %57 = sbr.rel (0) target = $region25
    $region24: #{tpu_custom_call.1} parent=1 // pred_region
      %58 = dma.done [#allocation9], 1024
    $region25: #{tpu_custom_call.1} parent=1 // pred_fallthru
      _
    // Predicated region
    $region26: #{tpu_custom_call.1} parent=1 // pred_check
      _
    $region27: #{tpu_custom_call.1} parent=1 // pred_check_branch
      %60 = sbr.rel (0) target = $region29
    $region28: #{tpu_custom_call.1} parent=1 // pred_region
      %61 = dma.done [#allocation9], 8192
    $region29: #{tpu_custom_call.1} parent=1 // pred_fallthru
      _
    %p62 = scmp.eq.s32.totalorder 0, 0
    // Predicated region
    $region30: #{tpu_custom_call.1} parent=1 // pred_check
      %p63 = pneg %p62
    $region31: #{tpu_custom_call.1} parent=1 // pred_check_branch
      %65 = sbr.rel (%p63) target = $region33
    $region32: #{tpu_custom_call.1} parent=1 // pred_region
      %66 = vst [vmem:[#allocation3] sm:$0xff] 0.0
      %67 = vst [vmem:[#allocation4] sm:$0xff] 0.0
    $region33: #{tpu_custom_call.1} parent=1 // pred_fallthru
      _
    %v68 = vld [vmem:[#allocation5] sm:$0xff]
    %v69 = vld [vmem:[#allocation5 + $0x8] sm:$0xff]
    %v70 = vld [vmem:[#allocation5 + $0x10] sm:$0xff]
    %v71 = vld [vmem:[#allocation5 + $0x18] sm:$0xff]
    %v72 = vld [vmem:[#allocation5 + $0x20] sm:$0xff]
    %v73 = vld [vmem:[#allocation5 + $0x28] sm:$0xff]
    %v74 = vld [vmem:[#allocation5 + $0x30] sm:$0xff]
    %v75 = vld [vmem:[#allocation5 + $0x38] sm:$0xff]
    %v76 = vld [vmem:[#allocation8] sm:$0xff]
    %v77 = vld [vmem:[#allocation8 + $0x8] sm:$0xff]
    %v78 = vld [vmem:[#allocation8 + $0x10] sm:$0xff]
    %v79 = vld [vmem:[#allocation8 + $0x18] sm:$0xff]
    %v80 = vld [vmem:[#allocation8 + $0x20] sm:$0xff]
    %v81 = vld [vmem:[#allocation8 + $0x28] sm:$0xff]
    %v82 = vld [vmem:[#allocation8 + $0x30] sm:$0xff]
    %v83 = vld [vmem:[#allocation8 + $0x38] sm:$0xff]
    %v84 = vld [vmem:[%s3] sm:$0xf]
    %v86 = vlaneseq
    %v87 = vshrl.u32 %v86, 7
    %v88 = vsub.s32 0, %v87
    %v89 = vrot.slane %v84, %v88
    %v90 = vlaneseq
    %v91 = vshrl.u32 %v90, 7
    %v92 = vsub.s32 1, %v91
    %v93 = vrot.slane %v84, %v92
    %v94 = vlaneseq
    %v95 = vshrl.u32 %v94, 7
    %v96 = vsub.s32 2, %v95
    %v97 = vrot.slane %v84, %v96
    %v98 = vlaneseq
    %v99 = vshrl.u32 %v98, 7
    %v100 = vsub.s32 3, %v99
    %v101 = vrot.slane %v84, %v100
    %vm106 = vcmask 130048
    %v108 = vsel %vm106, %v68, 0
    %v111 = vsel %vm106, %v69, 0
    %v114 = vsel %vm106, %v70, 0
    %v117 = vsel %vm106, %v71, 0
    %v120 = vsel %vm106, %v72, 0
    %v123 = vsel %vm106, %v73, 0
    %v126 = vsel %vm106, %v74, 0
    %v129 = vsel %vm106, %v75, 0
    %131 = vmatprep.subr.mxu0 %v77
    %132 = vmatpush1.msra.mxu0 %v76
    %133 = vmatprep.subr.mxu0 %v81
    %134 = vmatpush1.msra.mxu0 %v80
    %135 = vmatprep.subr.mxu0 0.0
    %136 = vmatpush1.msra.mxu0 0.0
    %137 = vmatprep.subr.mxu0 0.0
    %138 = vmatpush1.msra.mxu0 0.0
    %139 = vmatprep.subr.mxu0 0.0
    %140 = vmatpush1.msra.mxu0 0.0
    %141 = vmatprep.subr.mxu0 0.0
    %142 = vmatpush1.msra.mxu0 0.0
    %143 = vmatprep.subr.mxu0 0.0
    %144 = vmatpush1.msra.mxu0 0.0
    %145 = vmatprep.subr.mxu0 0.0
    %146 = vmatpush1.msra.mxu0 0.0
    %147 = vmatprep.subr.mxu0 0.0
    %148 = vmatpush1.msra.mxu0 0.0
    %149 = vmatprep.subr.mxu0 0.0
    %150 = vmatpush1.msra.mxu0 0.0
    %151 = vmatprep.subr.mxu0 0.0
    %152 = vmatpush1.msra.mxu0 0.0
    %153 = vmatprep.subr.mxu0 0.0
    %154 = vmatpush1.msra.mxu0 0.0
    %155 = vmatprep.subr.mxu0 0.0
    %156 = vmatpush1.msra.mxu0 0.0
    %157 = vmatprep.subr.mxu0 0.0
    %158 = vmatpush1.msra.mxu0 0.0
    %159 = vmatprep.subr.mxu0 0.0
    %160 = vmatpush1.msra.mxu0 0.0
    %161 = vmatprep.subr.mxu0 0.0
    %162 = vmatpush1.msra.mxu0 0.0
    %163 = vmatprep.subr.mxu0 0.0
    %164 = vmatpush1.msra.mxu0 0.0
    %165 = vmatprep.subr.mxu0 0.0
    %166 = vmatpush1.msra.mxu0 0.0
    %167 = vmatprep.subr.mxu0 0.0
    %168 = vmatpush1.msra.mxu0 0.0
    %169 = vmatprep.subr.mxu0 0.0
    %170 = vmatpush1.msra.mxu0 0.0
    %171 = vmatprep.subr.mxu0 0.0
    %172 = vmatpush1.msra.mxu0 0.0
    %173 = vmatprep.subr.mxu0 0.0
    %174 = vmatpush1.msra.mxu0 0.0
    %175 = vmatprep.subr.mxu0 0.0
    %176 = vmatpush1.msra.mxu0 0.0
    %177 = vmatprep.subr.mxu0 0.0
    %178 = vmatpush1.msra.mxu0 0.0
    %179 = vmatprep.subr.mxu0 0.0
    %180 = vmatpush1.msra.mxu0 0.0
    %181 = vmatprep.subr.mxu0 0.0
    %182 = vmatpush1.msra.mxu0 0.0
    %183 = vmatprep.subr.mxu0 0.0
    %184 = vmatpush1.msra.mxu0 0.0
    %185 = vmatprep.subr.mxu0 0.0
    %186 = vmatpush1.msra.mxu0 0.0
    %187 = vmatprep.subr.mxu0 0.0
    %188 = vmatpush1.msra.mxu0 0.0
    %189 = vmatprep.subr.mxu0 0.0
    %190 = vmatpush1.msra.mxu0 0.0
    %191 = vmatprep.subr.mxu0 0.0
    %192 = vmatpush1.msra.mxu0 0.0
    %193 = vmatprep.subr.mxu0 0.0
    %194 = vmatpush1.msra.mxu0 0.0
    %195 = vmatprep.mubr.f32.mxu0 0.0
    %196 = vmatmul.mubr.f32.gmra.mrb[0].mxu0 %v108
    %v197 = vpop.f32.mrb[0].mxu0
    %v198 = vadd.f32 %v89, %v197
    %v199 = vpop.f32.mrb[0].mxu0
    %v200 = vadd.f32 %v93, %v199
    %201 = vmatprep.mubr.f32.mxu0 0.0
    %202 = vmatmul.mubr.f32.gmra.mrb[0].mxu0 %v111
    %v203 = vpop.f32.mrb[0].mxu0
    %v204 = vadd.f32 %v89, %v203
    %v205 = vpop.f32.mrb[0].mxu0
    %v206 = vadd.f32 %v93, %v205
    %207 = vmatprep.mubr.f32.mxu0 0.0
    %208 = vmatmul.mubr.f32.gmra.mrb[0].mxu0 %v114
    %v209 = vpop.f32.mrb[0].mxu0
    %v210 = vadd.f32 %v89, %v209
    %v211 = vpop.f32.mrb[0].mxu0
    %v212 = vadd.f32 %v93, %v211
    %213 = vmatprep.mubr.f32.mxu0 0.0
    %214 = vmatmul.mubr.f32.gmra.mrb[0].mxu0 %v117
    %v215 = vpop.f32.mrb[0].mxu0
    %v216 = vadd.f32 %v89, %v215
    %v217 = vpop.f32.mrb[0].mxu0
    %v218 = vadd.f32 %v93, %v217
    %219 = vmatprep.mubr.f32.mxu0 0.0
    %220 = vmatmul.mubr.f32.gmra.mrb[0].mxu0 %v120
    %v221 = vpop.f32.mrb[0].mxu0
    %v222 = vadd.f32 %v89, %v221
    %v223 = vpop.f32.mrb[0].mxu0
    %v224 = vadd.f32 %v93, %v223
    %225 = vmatprep.mubr.f32.mxu0 0.0
    %226 = vmatmul.mubr.f32.gmra.mrb[0].mxu0 %v123
    %v227 = vpop.f32.mrb[0].mxu0
    %v228 = vadd.f32 %v89, %v227
    %v229 = vpop.f32.mrb[0].mxu0
    %v230 = vadd.f32 %v93, %v229
    %231 = vmatprep.mubr.f32.mxu0 0.0
    %232 = vmatmul.mubr.f32.gmra.mrb[0].mxu0 %v126
    %v233 = vpop.f32.mrb[0].mxu0
    %v234 = vadd.f32 %v89, %v233
    %v235 = vpop.f32.mrb[0].mxu0
    %v236 = vadd.f32 %v93, %v235
    %237 = vmatprep.mubr.f32.mxu0 0.0
    %238 = vmatmul.mubr.f32.gmra.mrb[0].mxu0 %v129
    %v239 = vpop.f32.mrb[0].mxu0
    %v240 = vadd.f32 %v89, %v239
    %v241 = vpop.f32.mrb[0].mxu0
    %v242 = vadd.f32 %v93, %v241
    %243 = vdwg.mxu0
    %244 = vmatprep.subr.mxu0 %v79
    %245 = vmatpush1.msra.mxu0 %v78
    %246 = vmatprep.subr.mxu0 %v83
    %247 = vmatpush1.msra.mxu0 %v82
    %248 = vmatprep.subr.mxu0 0.0
    %249 = vmatpush1.msra.mxu0 0.0
    %250 = vmatprep.subr.mxu0 0.0
    %251 = vmatpush1.msra.mxu0 0.0
    %252 = vmatprep.subr.mxu0 0.0
    %253 = vmatpush1.msra.mxu0 0.0
    %254 = vmatprep.subr.mxu0 0.0
    %255 = vmatpush1.msra.mxu0 0.0
    %256 = vmatprep.subr.mxu0 0.0
    %257 = vmatpush1.msra.mxu0 0.0
    %258 = vmatprep.subr.mxu0 0.0
    %259 = vmatpush1.msra.mxu0 0.0
    %260 = vmatprep.subr.mxu0 0.0
    %261 = vmatpush1.msra.mxu0 0.0
    %262 = vmatprep.subr.mxu0 0.0
    %263 = vmatpush1.msra.mxu0 0.0
    %264 = vmatprep.subr.mxu0 0.0
    %265 = vmatpush1.msra.mxu0 0.0
    %266 = vmatprep.subr.mxu0 0.0
    %267 = vmatpush1.msra.mxu0 0.0
    %268 = vmatprep.subr.mxu0 0.0
    %269 = vmatpush1.msra.mxu0 0.0
    %270 = vmatprep.subr.mxu0 0.0
    %271 = vmatpush1.msra.mxu0 0.0
    %272 = vmatprep.subr.mxu0 0.0
    %273 = vmatpush1.msra.mxu0 0.0
    %274 = vmatprep.subr.mxu0 0.0
    %275 = vmatpush1.msra.mxu0 0.0
    %276 = vmatprep.subr.mxu0 0.0
    %277 = vmatpush1.msra.mxu0 0.0
    %278 = vmatprep.subr.mxu0 0.0
    %279 = vmatpush1.msra.mxu0 0.0
    %280 = vmatprep.subr.mxu0 0.0
    %281 = vmatpush1.msra.mxu0 0.0
    %282 = vmatprep.subr.mxu0 0.0
    %283 = vmatpush1.msra.mxu0 0.0
    %284 = vmatprep.subr.mxu0 0.0
    %285 = vmatpush1.msra.mxu0 0.0
    %286 = vmatprep.subr.mxu0 0.0
    %287 = vmatpush1.msra.mxu0 0.0
    %288 = vmatprep.subr.mxu0 0.0
    %289 = vmatpush1.msra.mxu0 0.0
    %290 = vmatprep.subr.mxu0 0.0
    %291 = vmatpush1.msra.mxu0 0.0
    %292 = vmatprep.subr.mxu0 0.0
    %293 = vmatpush1.msra.mxu0 0.0
    %294 = vmatprep.subr.mxu0 0.0
    %295 = vmatpush1.msra.mxu0 0.0
    %296 = vmatprep.subr.mxu0 0.0
    %297 = vmatpush1.msra.mxu0 0.0
    %298 = vmatprep.subr.mxu0 0.0
    %299 = vmatpush1.msra.mxu0 0.0
    %300 = vmatprep.subr.mxu0 0.0
    %301 = vmatpush1.msra.mxu0 0.0
    %302 = vmatprep.subr.mxu0 0.0
    %303 = vmatpush1.msra.mxu0 0.0
    %304 = vmatprep.subr.mxu0 0.0
    %305 = vmatpush1.msra.mxu0 0.0
    %306 = vmatprep.subr.mxu0 0.0
    %307 = vmatpush1.msra.mxu0 0.0
    %308 = vmatprep.mubr.f32.mxu0 0.0
    %309 = vmatmul.mubr.f32.gmra.mrb[0].mxu0 %v108
    %v310 = vpop.f32.mrb[0].mxu0
    %v311 = vadd.f32 %v97, %v310
    %v312 = vpop.f32.mrb[0].mxu0
    %v313 = vadd.f32 %v101, %v312
    %314 = vmatprep.mubr.f32.mxu0 0.0
    %315 = vmatmul.mubr.f32.gmra.mrb[0].mxu0 %v111
    %v316 = vpop.f32.mrb[0].mxu0
    %v317 = vadd.f32 %v97, %v316
    %v318 = vpop.f32.mrb[0].mxu0
    %v319 = vadd.f32 %v101, %v318
    %320 = vmatprep.mubr.f32.mxu0 0.0
    %321 = vmatmul.mubr.f32.gmra.mrb[0].mxu0 %v114
    %v322 = vpop.f32.mrb[0].mxu0
    %v323 = vadd.f32 %v97, %v322
    %v324 = vpop.f32.mrb[0].mxu0
    %v325 = vadd.f32 %v101, %v324
    %326 = vmatprep.mubr.f32.mxu0 0.0
    %327 = vmatmul.mubr.f32.gmra.mrb[0].mxu0 %v117
    %v328 = vpop.f32.mrb[0].mxu0
    %v329 = vadd.f32 %v97, %v328
    %v330 = vpop.f32.mrb[0].mxu0
    %v331 = vadd.f32 %v101, %v330
    %332 = vmatprep.mubr.f32.mxu0 0.0
    %333 = vmatmul.mubr.f32.gmra.mrb[0].mxu0 %v120
    %v334 = vpop.f32.mrb[0].mxu0
    %v335 = vadd.f32 %v97, %v334
    %v336 = vpop.f32.mrb[0].mxu0
    %v337 = vadd.f32 %v101, %v336
    %338 = vmatprep.mubr.f32.mxu0 0.0
    %339 = vmatmul.mubr.f32.gmra.mrb[0].mxu0 %v123
    %v340 = vpop.f32.mrb[0].mxu0
    %v341 = vadd.f32 %v97, %v340
    %v342 = vpop.f32.mrb[0].mxu0
    %v343 = vadd.f32 %v101, %v342
    %344 = vmatprep.mubr.f32.mxu0 0.0
    %345 = vmatmul.mubr.f32.gmra.mrb[0].mxu0 %v126
    %v346 = vpop.f32.mrb[0].mxu0
    %v347 = vadd.f32 %v97, %v346
    %v348 = vpop.f32.mrb[0].mxu0
    %v349 = vadd.f32 %v101, %v348
    %350 = vmatprep.mubr.f32.mxu0 0.0
    %351 = vmatmul.mubr.f32.gmra.mrb[0].mxu0 %v129
    %v352 = vpop.f32.mrb[0].mxu0
    %v353 = vadd.f32 %v97, %v352
    %v354 = vpop.f32.mrb[0].mxu0
    %v355 = vadd.f32 %v101, %v354
    %356 = vdwg.mxu0
    %357 = vst [vmem:[#allocation2] sm:$0xff] %v198
    %358 = vst [vmem:[#allocation2 + $0x8] sm:$0xff] %v200
    %359 = vst [vmem:[#allocation2 + $0x10] sm:$0xff] %v311
    %360 = vst [vmem:[#allocation2 + $0x18] sm:$0xff] %v313
    %361 = vst [vmem:[#allocation2 + $0x20] sm:$0xff] %v204
    %362 = vst [vmem:[#allocation2 + $0x28] sm:$0xff] %v206
    %363 = vst [vmem:[#allocation2 + $0x30] sm:$0xff] %v317
    %364 = vst [vmem:[#allocation2 + $0x38] sm:$0xff] %v319
    %365 = vst [vmem:[#allocation2 + $0x40] sm:$0xff] %v210
    %366 = vst [vmem:[#allocation2 + $0x48] sm:$0xff] %v212
    %367 = vst [vmem:[#allocation2 + $0x50] sm:$0xff] %v323
    %368 = vst [vmem:[#allocation2 + $0x58] sm:$0xff] %v325
    %369 = vst [vmem:[#allocation2 + $0x60] sm:$0xff] %v216
    %370 = vst [vmem:[#allocation2 + $0x68] sm:$0xff] %v218
    %371 = vst [vmem:[#allocation2 + $0x70] sm:$0xff] %v329
    %372 = vst [vmem:[#allocation2 + $0x78] sm:$0xff] %v331
    %373 = vst [vmem:[#allocation2 + $0x80] sm:$0xff] %v222
    %374 = vst [vmem:[#allocation2 + $0x88] sm:$0xff] %v224
    %375 = vst [vmem:[#allocation2 + $0x90] sm:$0xff] %v335
    %376 = vst [vmem:[#allocation2 + $0x98] sm:$0xff] %v337
    %377 = vst [vmem:[#allocation2 + $0xa0] sm:$0xff] %v228
    %378 = vst [vmem:[#allocation2 + $0xa8] sm:$0xff] %v230
    %379 = vst [vmem:[#allocation2 + $0xb0] sm:$0xff] %v341
    %380 = vst [vmem:[#allocation2 + $0xb8] sm:$0xff] %v343
    %381 = vst [vmem:[#allocation2 + $0xc0] sm:$0xff] %v234
    %382 = vst [vmem:[#allocation2 + $0xc8] sm:$0xff] %v236
    %383 = vst [vmem:[#allocation2 + $0xd0] sm:$0xff] %v347
    %384 = vst [vmem:[#allocation2 + $0xd8] sm:$0xff] %v349
    %385 = vst [vmem:[#allocation2 + $0xe0] sm:$0xff] %v240
    %386 = vst [vmem:[#allocation2 + $0xe8] sm:$0xff] %v242
    %387 = vst [vmem:[#allocation2 + $0xf0] sm:$0xff] %v353
    %388 = vst [vmem:[#allocation2 + $0xf8] sm:$0xff] %v355
    %v389 = vld [vmem:[#allocation10] sm:$0xff]
    %v390 = vld [vmem:[#allocation10 + $0x8] sm:$0xff]
    %v391 = vld [vmem:[#allocation10 + $0x10] sm:$0xff]
    %v392 = vld [vmem:[#allocation10 + $0x18] sm:$0xff]
    %v393 = vld [vmem:[#allocation10 + $0x20] sm:$0xff]
    %v394 = vld [vmem:[#allocation10 + $0x28] sm:$0xff]
    %v395 = vld [vmem:[#allocation10 + $0x30] sm:$0xff]
    %v396 = vld [vmem:[#allocation10 + $0x38] sm:$0xff]
    %v397 = vld [vmem:[#allocation10 + $0x40] sm:$0xff]
    %v398 = vld [vmem:[#allocation10 + $0x48] sm:$0xff]
    %v399 = vld [vmem:[#allocation10 + $0x50] sm:$0xff]
    %v400 = vld [vmem:[#allocation10 + $0x58] sm:$0xff]
    %v401 = vld [vmem:[#allocation10 + $0x60] sm:$0xff]
    %v402 = vld [vmem:[#allocation10 + $0x68] sm:$0xff]
    %v403 = vld [vmem:[#allocation10 + $0x70] sm:$0xff]
    %v404 = vld [vmem:[#allocation10 + $0x78] sm:$0xff]
    %v405 = vld [vmem:[#allocation10 + $0x80] sm:$0xff]
    %v406 = vld [vmem:[#allocation10 + $0x88] sm:$0xff]
    %v407 = vld [vmem:[#allocation10 + $0x90] sm:$0xff]
    %v408 = vld [vmem:[#allocation10 + $0x98] sm:$0xff]
    %v409 = vld [vmem:[#allocation10 + $0xa0] sm:$0xff]
    %v410 = vld [vmem:[#allocation10 + $0xa8] sm:$0xff]
    %v411 = vld [vmem:[#allocation10 + $0xb0] sm:$0xff]
    %v412 = vld [vmem:[#allocation10 + $0xb8] sm:$0xff]
    %v413 = vld [vmem:[#allocation10 + $0xc0] sm:$0xff]
    %v414 = vld [vmem:[#allocation10 + $0xc8] sm:$0xff]
    %v415 = vld [vmem:[#allocation10 + $0xd0] sm:$0xff]
    %v416 = vld [vmem:[#allocation10 + $0xd8] sm:$0xff]
    %v417 = vld [vmem:[#allocation10 + $0xe0] sm:$0xff]
    %v418 = vld [vmem:[#allocation10 + $0xe8] sm:$0xff]
    %v419 = vld [vmem:[#allocation10 + $0xf0] sm:$0xff]
    %v420 = vld [vmem:[#allocation10 + $0xf8] sm:$0xff]
    %v421 = vld [vmem:[#allocation10 + $0x100] sm:$0xff]
    %v422 = vld [vmem:[#allocation10 + $0x108] sm:$0xff]
    %v423 = vld [vmem:[#allocation10 + $0x110] sm:$0xff]
    %v424 = vld [vmem:[#allocation10 + $0x118] sm:$0xff]
    %v425 = vld [vmem:[#allocation10 + $0x120] sm:$0xff]
    %v426 = vld [vmem:[#allocation10 + $0x128] sm:$0xff]
    %v427 = vld [vmem:[#allocation10 + $0x130] sm:$0xff]
    %v428 = vld [vmem:[#allocation10 + $0x138] sm:$0xff]
    %v429 = vld [vmem:[#allocation10 + $0x140] sm:$0xff]
    %v430 = vld [vmem:[#allocation10 + $0x148] sm:$0xff]
    %v431 = vld [vmem:[#allocation10 + $0x150] sm:$0xff]
    %v432 = vld [vmem:[#allocation10 + $0x158] sm:$0xff]
    %v433 = vld [vmem:[#allocation10 + $0x160] sm:$0xff]
    %v434 = vld [vmem:[#allocation10 + $0x168] sm:$0xff]
    %v435 = vld [vmem:[#allocation10 + $0x170] sm:$0xff]
    %v436 = vld [vmem:[#allocation10 + $0x178] sm:$0xff]
    %v437 = vld [vmem:[#allocation10 + $0x180] sm:$0xff]
    %v438 = vld [vmem:[#allocation10 + $0x188] sm:$0xff]
    %v439 = vld [vmem:[#allocation10 + $0x190] sm:$0xff]
    %v440 = vld [vmem:[#allocation10 + $0x198] sm:$0xff]
    %v441 = vld [vmem:[#allocation10 + $0x1a0] sm:$0xff]
    %v442 = vld [vmem:[#allocation10 + $0x1a8] sm:$0xff]
    %v443 = vld [vmem:[#allocation10 + $0x1b0] sm:$0xff]
    %v444 = vld [vmem:[#allocation10 + $0x1b8] sm:$0xff]
    %v445 = vld [vmem:[#allocation10 + $0x1c0] sm:$0xff]
    %v446 = vld [vmem:[#allocation10 + $0x1c8] sm:$0xff]
    %v447 = vld [vmem:[#allocation10 + $0x1d0] sm:$0xff]
    %v448 = vld [vmem:[#allocation10 + $0x1d8] sm:$0xff]
    %v449 = vld [vmem:[#allocation10 + $0x1e0] sm:$0xff]
    %v450 = vld [vmem:[#allocation10 + $0x1e8] sm:$0xff]
    %v451 = vld [vmem:[#allocation10 + $0x1f0] sm:$0xff]
    %v452 = vld [vmem:[#allocation10 + $0x1f8] sm:$0xff]
    %v453 = vld [vmem:[#allocation3] sm:$0xff]
    %v454 = vld [vmem:[#allocation4] sm:$0xff]
    %s455 = smul.u32 0, 4
    %s456 = smul.addr %s455, 8
    %s457 = scalar_lea.vmem [#allocation2], %s456
    %v458 = vld [vmem:[%s457] sm:$0xff]
    %v459 = vld [vmem:[%s457 + $0x8] sm:$0xff]
    %v460 = vld [vmem:[%s457 + $0x10] sm:$0xff]
    %v461 = vld [vmem:[%s457 + $0x18] sm:$0xff]
    %462 = vmatprep.subr.mxu0 %v390
    %463 = vmatpush1.msra.mxu0 %v389
    %464 = vmatprep.subr.mxu0 %v394
    %465 = vmatpush1.msra.mxu0 %v393
    %466 = vmatprep.subr.mxu0 %v398
    %467 = vmatpush1.msra.mxu0 %v397
    %468 = vmatprep.subr.mxu0 %v402
    %469 = vmatpush1.msra.mxu0 %v401
    %470 = vmatprep.subr.mxu0 %v406
    %471 = vmatpush1.msra.mxu0 %v405
    %472 = vmatprep.subr.mxu0 %v410
    %473 = vmatpush1.msra.mxu0 %v409
    %474 = vmatprep.subr.mxu0 %v414
    %475 = vmatpush1.msra.mxu0 %v413
    %476 = vmatprep.subr.mxu0 %v418
    %477 = vmatpush1.msra.mxu0 %v417
    %478 = vmatprep.subr.mxu0 %v422
    %479 = vmatpush1.msra.mxu0 %v421
    %480 = vmatprep.subr.mxu0 %v426
    %481 = vmatpush1.msra.mxu0 %v425
    %482 = vmatprep.subr.mxu0 %v430
    %483 = vmatpush1.msra.mxu0 %v429
    %484 = vmatprep.subr.mxu0 %v434
    %485 = vmatpush1.msra.mxu0 %v433
    %486 = vmatprep.subr.mxu0 %v438
    %487 = vmatpush1.msra.mxu0 %v437
    %488 = vmatprep.subr.mxu0 %v442
    %489 = vmatpush1.msra.mxu0 %v441
    %490 = vmatprep.subr.mxu0 %v446
    %491 = vmatpush1.msra.mxu0 %v445
    %492 = vmatprep.subr.mxu0 %v450
    %493 = vmatpush1.msra.mxu0 %v449
    %494 = vmatprep.subr.mxu0 0.0
    %495 = vmatpush1.msra.mxu0 0.0
    %496 = vmatprep.subr.mxu0 0.0
    %497 = vmatpush1.msra.mxu0 0.0
    %498 = vmatprep.subr.mxu0 0.0
    %499 = vmatpush1.msra.mxu0 0.0
    %500 = vmatprep.subr.mxu0 0.0
    %501 = vmatpush1.msra.mxu0 0.0
    %502 = vmatprep.subr.mxu0 0.0
    %503 = vmatpush1.msra.mxu0 0.0
    %504 = vmatprep.subr.mxu0 0.0
    %505 = vmatpush1.msra.mxu0 0.0
    %506 = vmatprep.subr.mxu0 0.0
    %507 = vmatpush1.msra.mxu0 0.0
    %508 = vmatprep.subr.mxu0 0.0
    %509 = vmatpush1.msra.mxu0 0.0
    %510 = vmatprep.subr.mxu0 0.0
    %511 = vmatpush1.msra.mxu0 0.0
    %512 = vmatprep.subr.mxu0 0.0
    %513 = vmatpush1.msra.mxu0 0.0
    %514 = vmatprep.subr.mxu0 0.0
    %515 = vmatpush1.msra.mxu0 0.0
    %516 = vmatprep.subr.mxu0 0.0
    %517 = vmatpush1.msra.mxu0 0.0
    %518 = vmatprep.subr.mxu0 0.0
    %519 = vmatpush1.msra.mxu0 0.0
    %520 = vmatprep.subr.mxu0 0.0
    %521 = vmatpush1.msra.mxu0 0.0
    %522 = vmatprep.subr.mxu0 0.0
    %523 = vmatpush1.msra.mxu0 0.0
    %524 = vmatprep.subr.mxu0 0.0
    %525 = vmatpush1.msra.mxu0 0.0
    %526 = vmatprep.mubr.f32.mxu0 0.0
    %527 = vmatmul.mubr.f32.gmra.mrb[0].mxu0 %v453
    %v528 = vpop.f32.mrb[0].mxu0
    %v529 = vadd.f32 0.0, %v528
    %v530 = vpop.f32.mrb[0].mxu0
    %v531 = vadd.f32 0.0, %v530
    %532 = vdwg.mxu0
    %533 = vmatprep.subr.mxu0 %v392
    %534 = vmatpush1.msra.mxu0 %v391
    %535 = vmatprep.subr.mxu0 %v396
    %536 = vmatpush1.msra.mxu0 %v395
    %537 = vmatprep.subr.mxu0 %v400
    %538 = vmatpush1.msra.mxu0 %v399
    %539 = vmatprep.subr.mxu0 %v404
    %540 = vmatpush1.msra.mxu0 %v403
    %541 = vmatprep.subr.mxu0 %v408
    %542 = vmatpush1.msra.mxu0 %v407
    %543 = vmatprep.subr.mxu0 %v412
    %544 = vmatpush1.msra.mxu0 %v411
    %545 = vmatprep.subr.mxu0 %v416
    %546 = vmatpush1.msra.mxu0 %v415
    %547 = vmatprep.subr.mxu0 %v420
    %548 = vmatpush1.msra.mxu0 %v419
    %549 = vmatprep.subr.mxu0 %v424
    %550 = vmatpush1.msra.mxu0 %v423
    %551 = vmatprep.subr.mxu0 %v428
    %552 = vmatpush1.msra.mxu0 %v427
    %553 = vmatprep.subr.mxu0 %v432
    %554 = vmatpush1.msra.mxu0 %v431
    %555 = vmatprep.subr.mxu0 %v436
    %556 = vmatpush1.msra.mxu0 %v435
    %557 = vmatprep.subr.mxu0 %v440
    %558 = vmatpush1.msra.mxu0 %v439
    %559 = vmatprep.subr.mxu0 %v444
    %560 = vmatpush1.msra.mxu0 %v443
    %561 = vmatprep.subr.mxu0 %v448
    %562 = vmatpush1.msra.mxu0 %v447
    %563 = vmatprep.subr.mxu0 %v452
    %564 = vmatpush1.msra.mxu0 %v451
    %565 = vmatprep.subr.mxu0 0.0
    %566 = vmatpush1.msra.mxu0 0.0
    %567 = vmatprep.subr.mxu0 0.0
    %568 = vmatpush1.msra.mxu0 0.0
    %569 = vmatprep.subr.mxu0 0.0
    %570 = vmatpush1.msra.mxu0 0.0
    %571 = vmatprep.subr.mxu0 0.0
    %572 = vmatpush1.msra.mxu0 0.0
    %573 = vmatprep.subr.mxu0 0.0
    %574 = vmatpush1.msra.mxu0 0.0
    %575 = vmatprep.subr.mxu0 0.0
    %576 = vmatpush1.msra.mxu0 0.0
    %577 = vmatprep.subr.mxu0 0.0
    %578 = vmatpush1.msra.mxu0 0.0
    %579 = vmatprep.subr.mxu0 0.0
    %580 = vmatpush1.msra.mxu0 0.0
    %581 = vmatprep.subr.mxu0 0.0
    %582 = vmatpush1.msra.mxu0 0.0
    %583 = vmatprep.subr.mxu0 0.0
    %584 = vmatpush1.msra.mxu0 0.0
    %585 = vmatprep.subr.mxu0 0.0
    %586 = vmatpush1.msra.mxu0 0.0
    %587 = vmatprep.subr.mxu0 0.0
    %588 = vmatpush1.msra.mxu0 0.0
    %589 = vmatprep.subr.mxu0 0.0
    %590 = vmatpush1.msra.mxu0 0.0
    %591 = vmatprep.subr.mxu0 0.0
    %592 = vmatpush1.msra.mxu0 0.0
    %593 = vmatprep.subr.mxu0 0.0
    %594 = vmatpush1.msra.mxu0 0.0
    %595 = vmatprep.subr.mxu0 0.0
    %596 = vmatpush1.msra.mxu0 0.0
    %597 = vmatprep.mubr.f32.mxu0 0.0
    %598 = vmatmul.mubr.f32.gmra.mrb[0].mxu0 %v453
    %v599 = vpop.f32.mrb[0].mxu0
    %v600 = vadd.f32 0.0, %v599
    %v601 = vpop.f32.mrb[0].mxu0
    %v602 = vadd.f32 0.0, %v601
    %603 = vdwg.mxu0
    %v604 = vadd.f32 %v458, %v529
    %v605 = vadd.f32 %v459, %v531
    %v606 = vadd.f32 %v460, %v600
    %v607 = vadd.f32 %v461, %v602
    %v608 = vxor.u32 %v605, 2147483648
    %v609 = vmul.f32 %v608, 1.442695
    %v610 = vpow.pop %v609
    %v611 = vadd.f32 %v610, 1.0
    %v612 = vrcp.pop %v611
    %v613 = vmul.f32 1.0, %v612
    %v614 = vmul.f32 %v454, %v613
    %v615 = vxor.u32 %v604, 2147483648
    %v616 = vmul.f32 %v615, 1.442695
    %v617 = vpow.pop %v616
    %v618 = vadd.f32 %v617, 1.0
    %v619 = vrcp.pop %v618
    %v620 = vmul.f32 1.0, %v619
    %v621 = vtanh.pop %v606
    %v622 = vmul.f32 %v620, %v621
    %v623 = vadd.f32 %v614, %v622
    %v624 = vtanh.pop %v623
    %v625 = vxor.u32 %v607, 2147483648
    %v626 = vmul.f32 %v625, 1.442695
    %v627 = vpow.pop %v626
    %v628 = vadd.f32 %v627, 1.0
    %v629 = vrcp.pop %v628
    %v630 = vmul.f32 1.0, %v629
    %v631 = vmul.f32 %v624, %v630
    %s632 = smul.u32 1, 4
    %s633 = smul.addr %s632, 8
    %s634 = scalar_lea.vmem [#allocation2], %s633
    %v635 = vld [vmem:[%s634] sm:$0xff]
    %v636 = vld [vmem:[%s634 + $0x8] sm:$0xff]
    %v637 = vld [vmem:[%s634 + $0x10] sm:$0xff]
    %v638 = vld [vmem:[%s634 + $0x18] sm:$0xff]
    %639 = vmatprep.subr.mxu0 %v390
    %640 = vmatpush1.msra.mxu0 %v389
    %641 = vmatprep.subr.mxu0 %v394
    %642 = vmatpush1.msra.mxu0 %v393
    %643 = vmatprep.subr.mxu0 %v398
    %644 = vmatpush1.msra.mxu0 %v397
    %645 = vmatprep.subr.mxu0 %v402
    %646 = vmatpush1.msra.mxu0 %v401
    %647 = vmatprep.subr.mxu0 %v406
    %648 = vmatpush1.msra.mxu0 %v405
    %649 = vmatprep.subr.mxu0 %v410
    %650 = vmatpush1.msra.mxu0 %v409
    %651 = vmatprep.subr.mxu0 %v414
    %652 = vmatpush1.msra.mxu0 %v413
    %653 = vmatprep.subr.mxu0 %v418
    %654 = vmatpush1.msra.mxu0 %v417
    %655 = vmatprep.subr.mxu0 %v422
    %656 = vmatpush1.msra.mxu0 %v421
    %657 = vmatprep.subr.mxu0 %v426
    %658 = vmatpush1.msra.mxu0 %v425
    %659 = vmatprep.subr.mxu0 %v430
    %660 = vmatpush1.msra.mxu0 %v429
    %661 = vmatprep.subr.mxu0 %v434
    %662 = vmatpush1.msra.mxu0 %v433
    %663 = vmatprep.subr.mxu0 %v438
    %664 = vmatpush1.msra.mxu0 %v437
    %665 = vmatprep.subr.mxu0 %v442
    %666 = vmatpush1.msra.mxu0 %v441
    %667 = vmatprep.subr.mxu0 %v446
    %668 = vmatpush1.msra.mxu0 %v445
    %669 = vmatprep.subr.mxu0 %v450
    %670 = vmatpush1.msra.mxu0 %v449
    %671 = vmatprep.subr.mxu0 0.0
    %672 = vmatpush1.msra.mxu0 0.0
    %673 = vmatprep.subr.mxu0 0.0
    %674 = vmatpush1.msra.mxu0 0.0
    %675 = vmatprep.subr.mxu0 0.0
    %676 = vmatpush1.msra.mxu0 0.0
    %677 = vmatprep.subr.mxu0 0.0
    %678 = vmatpush1.msra.mxu0 0.0
    %679 = vmatprep.subr.mxu0 0.0
    %680 = vmatpush1.msra.mxu0 0.0
    %681 = vmatprep.subr.mxu0 0.0
    %682 = vmatpush1.msra.mxu0 0.0
    %683 = vmatprep.subr.mxu0 0.0
    %684 = vmatpush1.msra.mxu0 0.0
    %685 = vmatprep.subr.mxu0 0.0
    %686 = vmatpush1.msra.mxu0 0.0
    %687 = vmatprep.subr.mxu0 0.0
    %688 = vmatpush1.msra.mxu0 0.0
    %689 = vmatprep.subr.mxu0 0.0
    %690 = vmatpush1.msra.mxu0 0.0
    %691 = vmatprep.subr.mxu0 0.0
    %692 = vmatpush1.msra.mxu0 0.0
    %693 = vmatprep.subr.mxu0 0.0
    %694 = vmatpush1.msra.mxu0 0.0
    %695 = vmatprep.subr.mxu0 0.0
    %696 = vmatpush1.msra.mxu0 0.0
    %697 = vmatprep.subr.mxu0 0.0
    %698 = vmatpush1.msra.mxu0 0.0
    %699 = vmatprep.subr.mxu0 0.0
    %700 = vmatpush1.msra.mxu0 0.0
    %701 = vmatprep.subr.mxu0 0.0
    %702 = vmatpush1.msra.mxu0 0.0
    %703 = vmatprep.mubr.f32.mxu0 0.0
    %704 = vmatmul.mubr.f32.gmra.mrb[0].mxu0 %v631
    %v705 = vpop.f32.mrb[0].mxu0
    %v706 = vadd.f32 0.0, %v705
    %v707 = vpop.f32.mrb[0].mxu0
    %v708 = vadd.f32 0.0, %v707
    %709 = vdwg.mxu0
    %710 = vmatprep.subr.mxu0 %v392
    %711 = vmatpush1.msra.mxu0 %v391
    %712 = vmatprep.subr.mxu0 %v396
    %713 = vmatpush1.msra.mxu0 %v395
    %714 = vmatprep.subr.mxu0 %v400
    %715 = vmatpush1.msra.mxu0 %v399
    %716 = vmatprep.subr.mxu0 %v404
    %717 = vmatpush1.msra.mxu0 %v403
    %718 = vmatprep.subr.mxu0 %v408
    %719 = vmatpush1.msra.mxu0 %v407
    %720 = vmatprep.subr.mxu0 %v412
    %721 = vmatpush1.msra.mxu0 %v411
    %722 = vmatprep.subr.mxu0 %v416
    %723 = vmatpush1.msra.mxu0 %v415
    %724 = vmatprep.subr.mxu0 %v420
    %725 = vmatpush1.msra.mxu0 %v419
    %726 = vmatprep.subr.mxu0 %v424
    %727 = vmatpush1.msra.mxu0 %v423
    %728 = vmatprep.subr.mxu0 %v428
    %729 = vmatpush1.msra.mxu0 %v427
    %730 = vmatprep.subr.mxu0 %v432
    %731 = vmatpush1.msra.mxu0 %v431
    %732 = vmatprep.subr.mxu0 %v436
    %733 = vmatpush1.msra.mxu0 %v435
    %734 = vmatprep.subr.mxu0 %v440
    %735 = vmatpush1.msra.mxu0 %v439
    %736 = vmatprep.subr.mxu0 %v444
    %737 = vmatpush1.msra.mxu0 %v443
    %738 = vmatprep.subr.mxu0 %v448
    %739 = vmatpush1.msra.mxu0 %v447
    %740 = vmatprep.subr.mxu0 %v452
    %741 = vmatpush1.msra.mxu0 %v451
    %742 = vmatprep.subr.mxu0 0.0
    %743 = vmatpush1.msra.mxu0 0.0
    %744 = vmatprep.subr.mxu0 0.0
    %745 = vmatpush1.msra.mxu0 0.0
    %746 = vmatprep.subr.mxu0 0.0
    %747 = vmatpush1.msra.mxu0 0.0
    %748 = vmatprep.subr.mxu0 0.0
    %749 = vmatpush1.msra.mxu0 0.0
    %750 = vmatprep.subr.mxu0 0.0
    %751 = vmatpush1.msra.mxu0 0.0
    %752 = vmatprep.subr.mxu0 0.0
    %753 = vmatpush1.msra.mxu0 0.0
    %754 = vmatprep.subr.mxu0 0.0
    %755 = vmatpush1.msra.mxu0 0.0
    %756 = vmatprep.subr.mxu0 0.0
    %757 = vmatpush1.msra.mxu0 0.0
    %758 = vmatprep.subr.mxu0 0.0
    %759 = vmatpush1.msra.mxu0 0.0
    %760 = vmatprep.subr.mxu0 0.0
    %761 = vmatpush1.msra.mxu0 0.0
    %762 = vmatprep.subr.mxu0 0.0
    %763 = vmatpush1.msra.mxu0 0.0
    %764 = vmatprep.subr.mxu0 0.0
    %765 = vmatpush1.msra.mxu0 0.0
    %766 = vmatprep.subr.mxu0 0.0
    %767 = vmatpush1.msra.mxu0 0.0
    %768 = vmatprep.subr.mxu0 0.0
    %769 = vmatpush1.msra.mxu0 0.0
    %770 = vmatprep.subr.mxu0 0.0
    %771 = vmatpush1.msra.mxu0 0.0
    %772 = vmatprep.subr.mxu0 0.0
    %773 = vmatpush1.msra.mxu0 0.0
    %774 = vmatprep.mubr.f32.mxu0 0.0
    %775 = vmatmul.mubr.f32.gmra.mrb[0].mxu0 %v631
    %v776 = vpop.f32.mrb[0].mxu0
    %v777 = vadd.f32 0.0, %v776
    %v778 = vpop.f32.mrb[0].mxu0
    %v779 = vadd.f32 0.0, %v778
    %780 = vdwg.mxu0
    %v781 = vadd.f32 %v635, %v706
    %v782 = vadd.f32 %v636, %v708
    %v783 = vadd.f32 %v637, %v777
    %v784 = vadd.f32 %v638, %v779
    %v785 = vxor.u32 %v782, 2147483648
    %v786 = vmul.f32 %v785, 1.442695
    %v787 = vpow.pop %v786
    %v788 = vadd.f32 %v787, 1.0
    %v789 = vrcp.pop %v788
    %v790 = vmul.f32 1.0, %v789
    %v791 = vmul.f32 %v623, %v790
    %v792 = vxor.u32 %v781, 2147483648
    %v793 = vmul.f32 %v792, 1.442695
    %v794 = vpow.pop %v793
    %v795 = vadd.f32 %v794, 1.0
    %v796 = vrcp.pop %v795
    %v797 = vmul.f32 1.0, %v796
    %v798 = vtanh.pop %v783
    %v799 = vmul.f32 %v797, %v798
    %v800 = vadd.f32 %v791, %v799
    %v801 = vtanh.pop %v800
    %v802 = vxor.u32 %v784, 2147483648
    %v803 = vmul.f32 %v802, 1.442695
    %v804 = vpow.pop %v803
    %v805 = vadd.f32 %v804, 1.0
    %v806 = vrcp.pop %v805
    %v807 = vmul.f32 1.0, %v806
    %v808 = vmul.f32 %v801, %v807
    %s809 = smul.u32 2, 4
    %s810 = smul.addr %s809, 8
    %s811 = scalar_lea.vmem [#allocation2], %s810
    %v812 = vld [vmem:[%s811] sm:$0xff]
    %v813 = vld [vmem:[%s811 + $0x8] sm:$0xff]
    %v814 = vld [vmem:[%s811 + $0x10] sm:$0xff]
    %v815 = vld [vmem:[%s811 + $0x18] sm:$0xff]
    %816 = vmatprep.subr.mxu0 %v390
    %817 = vmatpush1.msra.mxu0 %v389
    %818 = vmatprep.subr.mxu0 %v394
    %819 = vmatpush1.msra.mxu0 %v393
    %820 = vmatprep.subr.mxu0 %v398
    %821 = vmatpush1.msra.mxu0 %v397
    %822 = vmatprep.subr.mxu0 %v402
    %823 = vmatpush1.msra.mxu0 %v401
    %824 = vmatprep.subr.mxu0 %v406
    %825 = vmatpush1.msra.mxu0 %v405
    %826 = vmatprep.subr.mxu0 %v410
    %827 = vmatpush1.msra.mxu0 %v409
    %828 = vmatprep.subr.mxu0 %v414
    %829 = vmatpush1.msra.mxu0 %v413
    %830 = vmatprep.subr.mxu0 %v418
    %831 = vmatpush1.msra.mxu0 %v417
    %832 = vmatprep.subr.mxu0 %v422
    %833 = vmatpush1.msra.mxu0 %v421
    %834 = vmatprep.subr.mxu0 %v426
    %835 = vmatpush1.msra.mxu0 %v425
    %836 = vmatprep.subr.mxu0 %v430
    %837 = vmatpush1.msra.mxu0 %v429
    %838 = vmatprep.subr.mxu0 %v434
    %839 = vmatpush1.msra.mxu0 %v433
    %840 = vmatprep.subr.mxu0 %v438
    %841 = vmatpush1.msra.mxu0 %v437
    %842 = vmatprep.subr.mxu0 %v442
    %843 = vmatpush1.msra.mxu0 %v441
    %844 = vmatprep.subr.mxu0 %v446
    %845 = vmatpush1.msra.mxu0 %v445
    %846 = vmatprep.subr.mxu0 %v450
    %847 = vmatpush1.msra.mxu0 %v449
    %848 = vmatprep.subr.mxu0 0.0
    %849 = vmatpush1.msra.mxu0 0.0
    %850 = vmatprep.subr.mxu0 0.0
    %851 = vmatpush1.msra.mxu0 0.0
    %852 = vmatprep.subr.mxu0 0.0
    %853 = vmatpush1.msra.mxu0 0.0
    %854 = vmatprep.subr.mxu0 0.0
    %855 = vmatpush1.msra.mxu0 0.0
    %856 = vmatprep.subr.mxu0 0.0
    %857 = vmatpush1.msra.mxu0 0.0
    %858 = vmatprep.subr.mxu0 0.0
    %859 = vmatpush1.msra.mxu0 0.0
    %860 = vmatprep.subr.mxu0 0.0
    %861 = vmatpush1.msra.mxu0 0.0
    %862 = vmatprep.subr.mxu0 0.0
    %863 = vmatpush1.msra.mxu0 0.0
    %864 = vmatprep.subr.mxu0 0.0
    %865 = vmatpush1.msra.mxu0 0.0
    %866 = vmatprep.subr.mxu0 0.0
    %867 = vmatpush1.msra.mxu0 0.0
    %868 = vmatprep.subr.mxu0 0.0
    %869 = vmatpush1.msra.mxu0 0.0
    %870 = vmatprep.subr.mxu0 0.0
    %871 = vmatpush1.msra.mxu0 0.0
    %872 = vmatprep.subr.mxu0 0.0
    %873 = vmatpush1.msra.mxu0 0.0
    %874 = vmatprep.subr.mxu0 0.0
    %875 = vmatpush1.msra.mxu0 0.0
    %876 = vmatprep.subr.mxu0 0.0
    %877 = vmatpush1.msra.mxu0 0.0
    %878 = vmatprep.subr.mxu0 0.0
    %879 = vmatpush1.msra.mxu0 0.0
    %880 = vmatprep.mubr.f32.mxu0 0.0
    %881 = vmatmul.mubr.f32.gmra.mrb[0].mxu0 %v808
    %v882 = vpop.f32.mrb[0].mxu0
    %v883 = vadd.f32 0.0, %v882
    %v884 = vpop.f32.mrb[0].mxu0
    %v885 = vadd.f32 0.0, %v884
    %886 = vdwg.mxu0
    %887 = vmatprep.subr.mxu0 %v392
    %888 = vmatpush1.msra.mxu0 %v391
    %889 = vmatprep.subr.mxu0 %v396
    %890 = vmatpush1.msra.mxu0 %v395
    %891 = vmatprep.subr.mxu0 %v400
    %892 = vmatpush1.msra.mxu0 %v399
    %893 = vmatprep.subr.mxu0 %v404
    %894 = vmatpush1.msra.mxu0 %v403
    %895 = vmatprep.subr.mxu0 %v408
    %896 = vmatpush1.msra.mxu0 %v407
    %897 = vmatprep.subr.mxu0 %v412
    %898 = vmatpush1.msra.mxu0 %v411
    %899 = vmatprep.subr.mxu0 %v416
    %900 = vmatpush1.msra.mxu0 %v415
    %901 = vmatprep.subr.mxu0 %v420
    %902 = vmatpush1.msra.mxu0 %v419
    %903 = vmatprep.subr.mxu0 %v424
    %904 = vmatpush1.msra.mxu0 %v423
    %905 = vmatprep.subr.mxu0 %v428
    %906 = vmatpush1.msra.mxu0 %v427
    %907 = vmatprep.subr.mxu0 %v432
    %908 = vmatpush1.msra.mxu0 %v431
    %909 = vmatprep.subr.mxu0 %v436
    %910 = vmatpush1.msra.mxu0 %v435
    %911 = vmatprep.subr.mxu0 %v440
    %912 = vmatpush1.msra.mxu0 %v439
    %913 = vmatprep.subr.mxu0 %v444
    %914 = vmatpush1.msra.mxu0 %v443
    %915 = vmatprep.subr.mxu0 %v448
    %916 = vmatpush1.msra.mxu0 %v447
    %917 = vmatprep.subr.mxu0 %v452
    %918 = vmatpush1.msra.mxu0 %v451
    %919 = vmatprep.subr.mxu0 0.0
    %920 = vmatpush1.msra.mxu0 0.0
    %921 = vmatprep.subr.mxu0 0.0
    %922 = vmatpush1.msra.mxu0 0.0
    %923 = vmatprep.subr.mxu0 0.0
    %924 = vmatpush1.msra.mxu0 0.0
    %925 = vmatprep.subr.mxu0 0.0
    %926 = vmatpush1.msra.mxu0 0.0
    %927 = vmatprep.subr.mxu0 0.0
    %928 = vmatpush1.msra.mxu0 0.0
    %929 = vmatprep.subr.mxu0 0.0
    %930 = vmatpush1.msra.mxu0 0.0
    %931 = vmatprep.subr.mxu0 0.0
    %932 = vmatpush1.msra.mxu0 0.0
    %933 = vmatprep.subr.mxu0 0.0
    %934 = vmatpush1.msra.mxu0 0.0
    %935 = vmatprep.subr.mxu0 0.0
    %936 = vmatpush1.msra.mxu0 0.0
    %937 = vmatprep.subr.mxu0 0.0
    %938 = vmatpush1.msra.mxu0 0.0
    %939 = vmatprep.subr.mxu0 0.0
    %940 = vmatpush1.msra.mxu0 0.0
    %941 = vmatprep.subr.mxu0 0.0
    %942 = vmatpush1.msra.mxu0 0.0
    %943 = vmatprep.subr.mxu0 0.0
    %944 = vmatpush1.msra.mxu0 0.0
    %945 = vmatprep.subr.mxu0 0.0
    %946 = vmatpush1.msra.mxu0 0.0
    %947 = vmatprep.subr.mxu0 0.0
    %948 = vmatpush1.msra.mxu0 0.0
    %949 = vmatprep.subr.mxu0 0.0
    %950 = vmatpush1.msra.mxu0 0.0
    %951 = vmatprep.mubr.f32.mxu0 0.0
    %952 = vmatmul.mubr.f32.gmra.mrb[0].mxu0 %v808
    %v953 = vpop.f32.mrb[0].mxu0
    %v954 = vadd.f32 0.0, %v953
    %v955 = vpop.f32.mrb[0].mxu0
    %v956 = vadd.f32 0.0, %v955
    %957 = vdwg.mxu0
    %v958 = vadd.f32 %v812, %v883
    %v959 = vadd.f32 %v813, %v885
    %v960 = vadd.f32 %v814, %v954
    %v961 = vadd.f32 %v815, %v956
    %v962 = vxor.u32 %v959, 2147483648
    %v963 = vmul.f32 %v962, 1.442695
    %v964 = vpow.pop %v963
    %v965 = vadd.f32 %v964, 1.0
    %v966 = vrcp.pop %v965
    %v967 = vmul.f32 1.0, %v966
    %v968 = vmul.f32 %v800, %v967
    %v969 = vxor.u32 %v958, 2147483648
    %v970 = vmul.f32 %v969, 1.442695
    %v971 = vpow.pop %v970
    %v972 = vadd.f32 %v971, 1.0
    %v973 = vrcp.pop %v972
    %v974 = vmul.f32 1.0, %v973
    %v975 = vtanh.pop %v960
    %v976 = vmul.f32 %v974, %v975
    %v977 = vadd.f32 %v968, %v976
    %v978 = vtanh.pop %v977
    %v979 = vxor.u32 %v961, 2147483648
    %v980 = vmul.f32 %v979, 1.442695
    %v981 = vpow.pop %v980
    %v982 = vadd.f32 %v981, 1.0
    %v983 = vrcp.pop %v982
    %v984 = vmul.f32 1.0, %v983
    %v985 = vmul.f32 %v978, %v984
    %s986 = smul.u32 3, 4
    %s987 = smul.addr %s986, 8
    %s988 = scalar_lea.vmem [#allocation2], %s987
    %v989 = vld [vmem:[%s988] sm:$0xff]
    %v990 = vld [vmem:[%s988 + $0x8] sm:$0xff]
    %v991 = vld [vmem:[%s988 + $0x10] sm:$0xff]
    %v992 = vld [vmem:[%s988 + $0x18] sm:$0xff]
    %993 = vmatprep.subr.mxu0 %v390
    %994 = vmatpush1.msra.mxu0 %v389
    %995 = vmatprep.subr.mxu0 %v394
    %996 = vmatpush1.msra.mxu0 %v393
    %997 = vmatprep.subr.mxu0 %v398
    %998 = vmatpush1.msra.mxu0 %v397
    %999 = vmatprep.subr.mxu0 %v402
    %1000 = vmatpush1.msra.mxu0 %v401
    %1001 = vmatprep.subr.mxu0 %v406
    %1002 = vmatpush1.msra.mxu0 %v405
    %1003 = vmatprep.subr.mxu0 %v410
    %1004 = vmatpush1.msra.mxu0 %v409
    %1005 = vmatprep.subr.mxu0 %v414
    %1006 = vmatpush1.msra.mxu0 %v413
    %1007 = vmatprep.subr.mxu0 %v418
    %1008 = vmatpush1.msra.mxu0 %v417
    %1009 = vmatprep.subr.mxu0 %v422
    %1010 = vmatpush1.msra.mxu0 %v421
    %1011 = vmatprep.subr.mxu0 %v426
    %1012 = vmatpush1.msra.mxu0 %v425
    %1013 = vmatprep.subr.mxu0 %v430
    %1014 = vmatpush1.msra.mxu0 %v429
    %1015 = vmatprep.subr.mxu0 %v434
    %1016 = vmatpush1.msra.mxu0 %v433
    %1017 = vmatprep.subr.mxu0 %v438
    %1018 = vmatpush1.msra.mxu0 %v437
    %1019 = vmatprep.subr.mxu0 %v442
    %1020 = vmatpush1.msra.mxu0 %v441
    %1021 = vmatprep.subr.mxu0 %v446
    %1022 = vmatpush1.msra.mxu0 %v445
    %1023 = vmatprep.subr.mxu0 %v450
    %1024 = vmatpush1.msra.mxu0 %v449
    %1025 = vmatprep.subr.mxu0 0.0
    %1026 = vmatpush1.msra.mxu0 0.0
    %1027 = vmatprep.subr.mxu0 0.0
    %1028 = vmatpush1.msra.mxu0 0.0
    %1029 = vmatprep.subr.mxu0 0.0
    %1030 = vmatpush1.msra.mxu0 0.0
    %1031 = vmatprep.subr.mxu0 0.0
    %1032 = vmatpush1.msra.mxu0 0.0
    %1033 = vmatprep.subr.mxu0 0.0
    %1034 = vmatpush1.msra.mxu0 0.0
    %1035 = vmatprep.subr.mxu0 0.0
    %1036 = vmatpush1.msra.mxu0 0.0
    %1037 = vmatprep.subr.mxu0 0.0
    %1038 = vmatpush1.msra.mxu0 0.0
    %1039 = vmatprep.subr.mxu0 0.0
    %1040 = vmatpush1.msra.mxu0 0.0
    %1041 = vmatprep.subr.mxu0 0.0
    %1042 = vmatpush1.msra.mxu0 0.0
    %1043 = vmatprep.subr.mxu0 0.0
    %1044 = vmatpush1.msra.mxu0 0.0
    %1045 = vmatprep.subr.mxu0 0.0
    %1046 = vmatpush1.msra.mxu0 0.0
    %1047 = vmatprep.subr.mxu0 0.0
    %1048 = vmatpush1.msra.mxu0 0.0
    %1049 = vmatprep.subr.mxu0 0.0
    %1050 = vmatpush1.msra.mxu0 0.0
    %1051 = vmatprep.subr.mxu0 0.0
    %1052 = vmatpush1.msra.mxu0 0.0
    %1053 = vmatprep.subr.mxu0 0.0
    %1054 = vmatpush1.msra.mxu0 0.0
    %1055 = vmatprep.subr.mxu0 0.0
    %1056 = vmatpush1.msra.mxu0 0.0
    %1057 = vmatprep.mubr.f32.mxu0 0.0
    %1058 = vmatmul.mubr.f32.gmra.mrb[0].mxu0 %v985
    %v1059 = vpop.f32.mrb[0].mxu0
    %v1060 = vadd.f32 0.0, %v1059
    %v1061 = vpop.f32.mrb[0].mxu0
    %v1062 = vadd.f32 0.0, %v1061
    %1063 = vdwg.mxu0
    %1064 = vmatprep.subr.mxu0 %v392
    %1065 = vmatpush1.msra.mxu0 %v391
    %1066 = vmatprep.subr.mxu0 %v396
    %1067 = vmatpush1.msra.mxu0 %v395
    %1068 = vmatprep.subr.mxu0 %v400
    %1069 = vmatpush1.msra.mxu0 %v399
    %1070 = vmatprep.subr.mxu0 %v404
    %1071 = vmatpush1.msra.mxu0 %v403
    %1072 = vmatprep.subr.mxu0 %v408
    %1073 = vmatpush1.msra.mxu0 %v407
    %1074 = vmatprep.subr.mxu0 %v412
    %1075 = vmatpush1.msra.mxu0 %v411
    %1076 = vmatprep.subr.mxu0 %v416
    %1077 = vmatpush1.msra.mxu0 %v415
    %1078 = vmatprep.subr.mxu0 %v420
    %1079 = vmatpush1.msra.mxu0 %v419
    %1080 = vmatprep.subr.mxu0 %v424
    %1081 = vmatpush1.msra.mxu0 %v423
    %1082 = vmatprep.subr.mxu0 %v428
    %1083 = vmatpush1.msra.mxu0 %v427
    %1084 = vmatprep.subr.mxu0 %v432
    %1085 = vmatpush1.msra.mxu0 %v431
    %1086 = vmatprep.subr.mxu0 %v436
    %1087 = vmatpush1.msra.mxu0 %v435
    %1088 = vmatprep.subr.mxu0 %v440
    %1089 = vmatpush1.msra.mxu0 %v439
    %1090 = vmatprep.subr.mxu0 %v444
    %1091 = vmatpush1.msra.mxu0 %v443
    %1092 = vmatprep.subr.mxu0 %v448
    %1093 = vmatpush1.msra.mxu0 %v447
    %1094 = vmatprep.subr.mxu0 %v452
    %1095 = vmatpush1.msra.mxu0 %v451
    %1096 = vmatprep.subr.mxu0 0.0
    %1097 = vmatpush1.msra.mxu0 0.0
    %1098 = vmatprep.subr.mxu0 0.0
    %1099 = vmatpush1.msra.mxu0 0.0
    %1100 = vmatprep.subr.mxu0 0.0
    %1101 = vmatpush1.msra.mxu0 0.0
    %1102 = vmatprep.subr.mxu0 0.0
    %1103 = vmatpush1.msra.mxu0 0.0
    %1104 = vmatprep.subr.mxu0 0.0
    %1105 = vmatpush1.msra.mxu0 0.0
    %1106 = vmatprep.subr.mxu0 0.0
    %1107 = vmatpush1.msra.mxu0 0.0
    %1108 = vmatprep.subr.mxu0 0.0
    %1109 = vmatpush1.msra.mxu0 0.0
    %1110 = vmatprep.subr.mxu0 0.0
    %1111 = vmatpush1.msra.mxu0 0.0
    %1112 = vmatprep.subr.mxu0 0.0
    %1113 = vmatpush1.msra.mxu0 0.0
    %1114 = vmatprep.subr.mxu0 0.0
    %1115 = vmatpush1.msra.mxu0 0.0
    %1116 = vmatprep.subr.mxu0 0.0
    %1117 = vmatpush1.msra.mxu0 0.0
    %1118 = vmatprep.subr.mxu0 0.0
    %1119 = vmatpush1.msra.mxu0 0.0
    %1120 = vmatprep.subr.mxu0 0.0
    %1121 = vmatpush1.msra.mxu0 0.0
    %1122 = vmatprep.subr.mxu0 0.0
    %1123 = vmatpush1.msra.mxu0 0.0
    %1124 = vmatprep.subr.mxu0 0.0
    %1125 = vmatpush1.msra.mxu0 0.0
    %1126 = vmatprep.subr.mxu0 0.0
    %1127 = vmatpush1.msra.mxu0 0.0
    %1128 = vmatprep.mubr.f32.mxu0 0.0
    %1129 = vmatmul.mubr.f32.gmra.mrb[0].mxu0 %v985
    %v1130 = vpop.f32.mrb[0].mxu0
    %v1131 = vadd.f32 0.0, %v1130
    %v1132 = vpop.f32.mrb[0].mxu0
    %v1133 = vadd.f32 0.0, %v1132
    %1134 = vdwg.mxu0
    %v1135 = vadd.f32 %v989, %v1060
    %v1136 = vadd.f32 %v990, %v1062
    %v1137 = vadd.f32 %v991, %v1131
    %v1138 = vadd.f32 %v992, %v1133
    %v1139 = vxor.u32 %v1136, 2147483648
    %v1140 = vmul.f32 %v1139, 1.442695
    %v1141 = vpow.pop %v1140
    %v1142 = vadd.f32 %v1141, 1.0
    %v1143 = vrcp.pop %v1142
    %v1144 = vmul.f32 1.0, %v1143
    %v1145 = vmul.f32 %v977, %v1144
    %v1146 = vxor.u32 %v1135, 2147483648
    %v1147 = vmul.f32 %v1146, 1.442695
    %v1148 = vpow.pop %v1147
    %v1149 = vadd.f32 %v1148, 1.0
    %v1150 = vrcp.pop %v1149
    %v1151 = vmul.f32 1.0, %v1150
    %v1152 = vtanh.pop %v1137
    %v1153 = vmul.f32 %v1151, %v1152
    %v1154 = vadd.f32 %v1145, %v1153
    %v1155 = vtanh.pop %v1154
    %v1156 = vxor.u32 %v1138, 2147483648
    %v1157 = vmul.f32 %v1156, 1.442695
    %v1158 = vpow.pop %v1157
    %v1159 = vadd.f32 %v1158, 1.0
    %v1160 = vrcp.pop %v1159
    %v1161 = vmul.f32 1.0, %v1160
    %v1162 = vmul.f32 %v1155, %v1161
    %s1163 = smul.u32 4, 4
    %s1164 = smul.addr %s1163, 8
    %s1165 = scalar_lea.vmem [#allocation2], %s1164
    %v1166 = vld [vmem:[%s1165] sm:$0xff]
    %v1167 = vld [vmem:[%s1165 + $0x8] sm:$0xff]
    %v1168 = vld [vmem:[%s1165 + $0x10] sm:$0xff]
    %v1169 = vld [vmem:[%s1165 + $0x18] sm:$0xff]
    %1170 = vmatprep.subr.mxu0 %v390
    %1171 = vmatpush1.msra.mxu0 %v389
    %1172 = vmatprep.subr.mxu0 %v394
    %1173 = vmatpush1.msra.mxu0 %v393
    %1174 = vmatprep.subr.mxu0 %v398
    %1175 = vmatpush1.msra.mxu0 %v397
    %1176 = vmatprep.subr.mxu0 %v402
    %1177 = vmatpush1.msra.mxu0 %v401
    %1178 = vmatprep.subr.mxu0 %v406
    %1179 = vmatpush1.msra.mxu0 %v405
    %1180 = vmatprep.subr.mxu0 %v410
    %1181 = vmatpush1.msra.mxu0 %v409
    %1182 = vmatprep.subr.mxu0 %v414
    %1183 = vmatpush1.msra.mxu0 %v413
    %1184 = vmatprep.subr.mxu0 %v418
    %1185 = vmatpush1.msra.mxu0 %v417
    %1186 = vmatprep.subr.mxu0 %v422
    %1187 = vmatpush1.msra.mxu0 %v421
    %1188 = vmatprep.subr.mxu0 %v426
    %1189 = vmatpush1.msra.mxu0 %v425
    %1190 = vmatprep.subr.mxu0 %v430
    %1191 = vmatpush1.msra.mxu0 %v429
    %1192 = vmatprep.subr.mxu0 %v434
    %1193 = vmatpush1.msra.mxu0 %v433
    %1194 = vmatprep.subr.mxu0 %v438
    %1195 = vmatpush1.msra.mxu0 %v437
    %1196 = vmatprep.subr.mxu0 %v442
    %1197 = vmatpush1.msra.mxu0 %v441
    %1198 = vmatprep.subr.mxu0 %v446
    %1199 = vmatpush1.msra.mxu0 %v445
    %1200 = vmatprep.subr.mxu0 %v450
    %1201 = vmatpush1.msra.mxu0 %v449
    %1202 = vmatprep.subr.mxu0 0.0
    %1203 = vmatpush1.msra.mxu0 0.0
    %1204 = vmatprep.subr.mxu0 0.0
    %1205 = vmatpush1.msra.mxu0 0.0
    %1206 = vmatprep.subr.mxu0 0.0
    %1207 = vmatpush1.msra.mxu0 0.0
    %1208 = vmatprep.subr.mxu0 0.0
    %1209 = vmatpush1.msra.mxu0 0.0
    %1210 = vmatprep.subr.mxu0 0.0
    %1211 = vmatpush1.msra.mxu0 0.0
    %1212 = vmatprep.subr.mxu0 0.0
    %1213 = vmatpush1.msra.mxu0 0.0
    %1214 = vmatprep.subr.mxu0 0.0
    %1215 = vmatpush1.msra.mxu0 0.0
    %1216 = vmatprep.subr.mxu0 0.0
    %1217 = vmatpush1.msra.mxu0 0.0
    %1218 = vmatprep.subr.mxu0 0.0
    %1219 = vmatpush1.msra.mxu0 0.0
    %1220 = vmatprep.subr.mxu0 0.0
    %1221 = vmatpush1.msra.mxu0 0.0
    %1222 = vmatprep.subr.mxu0 0.0
    %1223 = vmatpush1.msra.mxu0 0.0
    %1224 = vmatprep.subr.mxu0 0.0
    %1225 = vmatpush1.msra.mxu0 0.0
    %1226 = vmatprep.subr.mxu0 0.0
    %1227 = vmatpush1.msra.mxu0 0.0
    %1228 = vmatprep.subr.mxu0 0.0
    %1229 = vmatpush1.msra.mxu0 0.0
    %1230 = vmatprep.subr.mxu0 0.0
    %1231 = vmatpush1.msra.mxu0 0.0
    %1232 = vmatprep.subr.mxu0 0.0
    %1233 = vmatpush1.msra.mxu0 0.0
    %1234 = vmatprep.mubr.f32.mxu0 0.0
    %1235 = vmatmul.mubr.f32.gmra.mrb[0].mxu0 %v1162
    %v1236 = vpop.f32.mrb[0].mxu0
    %v1237 = vadd.f32 0.0, %v1236
    %v1238 = vpop.f32.mrb[0].mxu0
    %v1239 = vadd.f32 0.0, %v1238
    %1240 = vdwg.mxu0
    %1241 = vmatprep.subr.mxu0 %v392
    %1242 = vmatpush1.msra.mxu0 %v391
    %1243 = vmatprep.subr.mxu0 %v396
    %1244 = vmatpush1.msra.mxu0 %v395
    %1245 = vmatprep.subr.mxu0 %v400
    %1246 = vmatpush1.msra.mxu0 %v399
    %1247 = vmatprep.subr.mxu0 %v404
    %1248 = vmatpush1.msra.mxu0 %v403
    %1249 = vmatprep.subr.mxu0 %v408
    %1250 = vmatpush1.msra.mxu0 %v407
    %1251 = vmatprep.subr.mxu0 %v412
    %1252 = vmatpush1.msra.mxu0 %v411
    %1253 = vmatprep.subr.mxu0 %v416
    %1254 = vmatpush1.msra.mxu0 %v415
    %1255 = vmatprep.subr.mxu0 %v420
    %1256 = vmatpush1.msra.mxu0 %v419
    %1257 = vmatprep.subr.mxu0 %v424
    %1258 = vmatpush1.msra.mxu0 %v423
    %1259 = vmatprep.subr.mxu0 %v428
    %1260 = vmatpush1.msra.mxu0 %v427
    %1261 = vmatprep.subr.mxu0 %v432
    %1262 = vmatpush1.msra.mxu0 %v431
    %1263 = vmatprep.subr.mxu0 %v436
    %1264 = vmatpush1.msra.mxu0 %v435
    %1265 = vmatprep.subr.mxu0 %v440
    %1266 = vmatpush1.msra.mxu0 %v439
    %1267 = vmatprep.subr.mxu0 %v444
    %1268 = vmatpush1.msra.mxu0 %v443
    %1269 = vmatprep.subr.mxu0 %v448
    %1270 = vmatpush1.msra.mxu0 %v447
    %1271 = vmatprep.subr.mxu0 %v452
    %1272 = vmatpush1.msra.mxu0 %v451
    %1273 = vmatprep.subr.mxu0 0.0
    %1274 = vmatpush1.msra.mxu0 0.0
    %1275 = vmatprep.subr.mxu0 0.0
    %1276 = vmatpush1.msra.mxu0 0.0
    %1277 = vmatprep.subr.mxu0 0.0
    %1278 = vmatpush1.msra.mxu0 0.0
    %1279 = vmatprep.subr.mxu0 0.0
    %1280 = vmatpush1.msra.mxu0 0.0
    %1281 = vmatprep.subr.mxu0 0.0
    %1282 = vmatpush1.msra.mxu0 0.0
    %1283 = vmatprep.subr.mxu0 0.0
    %1284 = vmatpush1.msra.mxu0 0.0
    %1285 = vmatprep.subr.mxu0 0.0
    %1286 = vmatpush1.msra.mxu0 0.0
    %1287 = vmatprep.subr.mxu0 0.0
    %1288 = vmatpush1.msra.mxu0 0.0
    %1289 = vmatprep.subr.mxu0 0.0
    %1290 = vmatpush1.msra.mxu0 0.0
    %1291 = vmatprep.subr.mxu0 0.0
    %1292 = vmatpush1.msra.mxu0 0.0
    %1293 = vmatprep.subr.mxu0 0.0
    %1294 = vmatpush1.msra.mxu0 0.0
    %1295 = vmatprep.subr.mxu0 0.0
    %1296 = vmatpush1.msra.mxu0 0.0
    %1297 = vmatprep.subr.mxu0 0.0
    %1298 = vmatpush1.msra.mxu0 0.0
    %1299 = vmatprep.subr.mxu0 0.0
    %1300 = vmatpush1.msra.mxu0 0.0
    %1301 = vmatprep.subr.mxu0 0.0
    %1302 = vmatpush1.msra.mxu0 0.0
    %1303 = vmatprep.subr.mxu0 0.0
    %1304 = vmatpush1.msra.mxu0 0.0
    %1305 = vmatprep.mubr.f32.mxu0 0.0
    %1306 = vmatmul.mubr.f32.gmra.mrb[0].mxu0 %v1162
    %v1307 = vpop.f32.mrb[0].mxu0
    %v1308 = vadd.f32 0.0, %v1307
    %v1309 = vpop.f32.mrb[0].mxu0
    %v1310 = vadd.f32 0.0, %v1309
    %1311 = vdwg.mxu0
    %v1312 = vadd.f32 %v1166, %v1237
    %v1313 = vadd.f32 %v1167, %v1239
    %v1314 = vadd.f32 %v1168, %v1308
    %v1315 = vadd.f32 %v1169, %v1310
    %v1316 = vxor.u32 %v1313, 2147483648
    %v1317 = vmul.f32 %v1316, 1.442695
    %v1318 = vpow.pop %v1317
    %v1319 = vadd.f32 %v1318, 1.0
    %v1320 = vrcp.pop %v1319
    %v1321 = vmul.f32 1.0, %v1320
    %v1322 = vmul.f32 %v1154, %v1321
    %v1323 = vxor.u32 %v1312, 2147483648
    %v1324 = vmul.f32 %v1323, 1.442695
    %v1325 = vpow.pop %v1324
    %v1326 = vadd.f32 %v1325, 1.0
    %v1327 = vrcp.pop %v1326
    %v1328 = vmul.f32 1.0, %v1327
    %v1329 = vtanh.pop %v1314
    %v1330 = vmul.f32 %v1328, %v1329
    %v1331 = vadd.f32 %v1322, %v1330
    %v1332 = vtanh.pop %v1331
    %v1333 = vxor.u32 %v1315, 2147483648
    %v1334 = vmul.f32 %v1333, 1.442695
    %v1335 = vpow.pop %v1334
    %v1336 = vadd.f32 %v1335, 1.0
    %v1337 = vrcp.pop %v1336
    %v1338 = vmul.f32 1.0, %v1337
    %v1339 = vmul.f32 %v1332, %v1338
    %s1340 = smul.u32 5, 4
    %s1341 = smul.addr %s1340, 8
    %s1342 = scalar_lea.vmem [#allocation2], %s1341
    %v1343 = vld [vmem:[%s1342] sm:$0xff]
    %v1344 = vld [vmem:[%s1342 + $0x8] sm:$0xff]
    %v1345 = vld [vmem:[%s1342 + $0x10] sm:$0xff]
    %v1346 = vld [vmem:[%s1342 + $0x18] sm:$0xff]
    %1347 = vmatprep.subr.mxu0 %v390
    %1348 = vmatpush1.msra.mxu0 %v389
    %1349 = vmatprep.subr.mxu0 %v394
    %1350 = vmatpush1.msra.mxu0 %v393
    %1351 = vmatprep.subr.mxu0 %v398
    %1352 = vmatpush1.msra.mxu0 %v397
    %1353 = vmatprep.subr.mxu0 %v402
    %1354 = vmatpush1.msra.mxu0 %v401
    %1355 = vmatprep.subr.mxu0 %v406
    %1356 = vmatpush1.msra.mxu0 %v405
    %1357 = vmatprep.subr.mxu0 %v410
    %1358 = vmatpush1.msra.mxu0 %v409
    %1359 = vmatprep.subr.mxu0 %v414
    %1360 = vmatpush1.msra.mxu0 %v413
    %1361 = vmatprep.subr.mxu0 %v418
    %1362 = vmatpush1.msra.mxu0 %v417
    %1363 = vmatprep.subr.mxu0 %v422
    %1364 = vmatpush1.msra.mxu0 %v421
    %1365 = vmatprep.subr.mxu0 %v426
    %1366 = vmatpush1.msra.mxu0 %v425
    %1367 = vmatprep.subr.mxu0 %v430
    %1368 = vmatpush1.msra.mxu0 %v429
    %1369 = vmatprep.subr.mxu0 %v434
    %1370 = vmatpush1.msra.mxu0 %v433
    %1371 = vmatprep.subr.mxu0 %v438
    %1372 = vmatpush1.msra.mxu0 %v437
    %1373 = vmatprep.subr.mxu0 %v442
    %1374 = vmatpush1.msra.mxu0 %v441
    %1375 = vmatprep.subr.mxu0 %v446
    %1376 = vmatpush1.msra.mxu0 %v445
    %1377 = vmatprep.subr.mxu0 %v450
    %1378 = vmatpush1.msra.mxu0 %v449
    %1379 = vmatprep.subr.mxu0 0.0
    %1380 = vmatpush1.msra.mxu0 0.0
    %1381 = vmatprep.subr.mxu0 0.0
    %1382 = vmatpush1.msra.mxu0 0.0
    %1383 = vmatprep.subr.mxu0 0.0
    %1384 = vmatpush1.msra.mxu0 0.0
    %1385 = vmatprep.subr.mxu0 0.0
    %1386 = vmatpush1.msra.mxu0 0.0
    %1387 = vmatprep.subr.mxu0 0.0
    %1388 = vmatpush1.msra.mxu0 0.0
    %1389 = vmatprep.subr.mxu0 0.0
    %1390 = vmatpush1.msra.mxu0 0.0
    %1391 = vmatprep.subr.mxu0 0.0
    %1392 = vmatpush1.msra.mxu0 0.0
    %1393 = vmatprep.subr.mxu0 0.0
    %1394 = vmatpush1.msra.mxu0 0.0
    %1395 = vmatprep.subr.mxu0 0.0
    %1396 = vmatpush1.msra.mxu0 0.0
    %1397 = vmatprep.subr.mxu0 0.0
    %1398 = vmatpush1.msra.mxu0 0.0
    %1399 = vmatprep.subr.mxu0 0.0
    %1400 = vmatpush1.msra.mxu0 0.0
    %1401 = vmatprep.subr.mxu0 0.0
    %1402 = vmatpush1.msra.mxu0 0.0
    %1403 = vmatprep.subr.mxu0 0.0
    %1404 = vmatpush1.msra.mxu0 0.0
    %1405 = vmatprep.subr.mxu0 0.0
    %1406 = vmatpush1.msra.mxu0 0.0
    %1407 = vmatprep.subr.mxu0 0.0
    %1408 = vmatpush1.msra.mxu0 0.0
    %1409 = vmatprep.subr.mxu0 0.0
    %1410 = vmatpush1.msra.mxu0 0.0
    %1411 = vmatprep.mubr.f32.mxu0 0.0
    %1412 = vmatmul.mubr.f32.gmra.mrb[0].mxu0 %v1339
    %v1413 = vpop.f32.mrb[0].mxu0
    %v1414 = vadd.f32 0.0, %v1413
    %v1415 = vpop.f32.mrb[0].mxu0
    %v1416 = vadd.f32 0.0, %v1415
    %1417 = vdwg.mxu0
    %1418 = vmatprep.subr.mxu0 %v392
    %1419 = vmatpush1.msra.mxu0 %v391
    %1420 = vmatprep.subr.mxu0 %v396
    %1421 = vmatpush1.msra.mxu0 %v395
    %1422 = vmatprep.subr.mxu0 %v400
    %1423 = vmatpush1.msra.mxu0 %v399
    %1424 = vmatprep.subr.mxu0 %v404
    %1425 = vmatpush1.msra.mxu0 %v403
    %1426 = vmatprep.subr.mxu0 %v408
    %1427 = vmatpush1.msra.mxu0 %v407
    %1428 = vmatprep.subr.mxu0 %v412
    %1429 = vmatpush1.msra.mxu0 %v411
    %1430 = vmatprep.subr.mxu0 %v416
    %1431 = vmatpush1.msra.mxu0 %v415
    %1432 = vmatprep.subr.mxu0 %v420
    %1433 = vmatpush1.msra.mxu0 %v419
    %1434 = vmatprep.subr.mxu0 %v424
    %1435 = vmatpush1.msra.mxu0 %v423
    %1436 = vmatprep.subr.mxu0 %v428
    %1437 = vmatpush1.msra.mxu0 %v427
    %1438 = vmatprep.subr.mxu0 %v432
    %1439 = vmatpush1.msra.mxu0 %v431
    %1440 = vmatprep.subr.mxu0 %v436
    %1441 = vmatpush1.msra.mxu0 %v435
    %1442 = vmatprep.subr.mxu0 %v440
    %1443 = vmatpush1.msra.mxu0 %v439
    %1444 = vmatprep.subr.mxu0 %v444
    %1445 = vmatpush1.msra.mxu0 %v443
    %1446 = vmatprep.subr.mxu0 %v448
    %1447 = vmatpush1.msra.mxu0 %v447
    %1448 = vmatprep.subr.mxu0 %v452
    %1449 = vmatpush1.msra.mxu0 %v451
    %1450 = vmatprep.subr.mxu0 0.0
    %1451 = vmatpush1.msra.mxu0 0.0
    %1452 = vmatprep.subr.mxu0 0.0
    %1453 = vmatpush1.msra.mxu0 0.0
    %1454 = vmatprep.subr.mxu0 0.0
    %1455 = vmatpush1.msra.mxu0 0.0
    %1456 = vmatprep.subr.mxu0 0.0
    %1457 = vmatpush1.msra.mxu0 0.0
    %1458 = vmatprep.subr.mxu0 0.0
    %1459 = vmatpush1.msra.mxu0 0.0
    %1460 = vmatprep.subr.mxu0 0.0
    %1461 = vmatpush1.msra.mxu0 0.0
    %1462 = vmatprep.subr.mxu0 0.0
    %1463 = vmatpush1.msra.mxu0 0.0
    %1464 = vmatprep.subr.mxu0 0.0
    %1465 = vmatpush1.msra.mxu0 0.0
    %1466 = vmatprep.subr.mxu0 0.0
    %1467 = vmatpush1.msra.mxu0 0.0
    %1468 = vmatprep.subr.mxu0 0.0
    %1469 = vmatpush1.msra.mxu0 0.0
    %1470 = vmatprep.subr.mxu0 0.0
    %1471 = vmatpush1.msra.mxu0 0.0
    %1472 = vmatprep.subr.mxu0 0.0
    %1473 = vmatpush1.msra.mxu0 0.0
    %1474 = vmatprep.subr.mxu0 0.0
    %1475 = vmatpush1.msra.mxu0 0.0
    %1476 = vmatprep.subr.mxu0 0.0
    %1477 = vmatpush1.msra.mxu0 0.0
    %1478 = vmatprep.subr.mxu0 0.0
    %1479 = vmatpush1.msra.mxu0 0.0
    %1480 = vmatprep.subr.mxu0 0.0
    %1481 = vmatpush1.msra.mxu0 0.0
    %1482 = vmatprep.mubr.f32.mxu0 0.0
    %1483 = vmatmul.mubr.f32.gmra.mrb[0].mxu0 %v1339
    %v1484 = vpop.f32.mrb[0].mxu0
    %v1485 = vadd.f32 0.0, %v1484
    %v1486 = vpop.f32.mrb[0].mxu0
    %v1487 = vadd.f32 0.0, %v1486
    %1488 = vdwg.mxu0
    %v1489 = vadd.f32 %v1343, %v1414
    %v1490 = vadd.f32 %v1344, %v1416
    %v1491 = vadd.f32 %v1345, %v1485
    %v1492 = vadd.f32 %v1346, %v1487
    %v1493 = vxor.u32 %v1490, 2147483648
    %v1494 = vmul.f32 %v1493, 1.442695
    %v1495 = vpow.pop %v1494
    %v1496 = vadd.f32 %v1495, 1.0
    %v1497 = vrcp.pop %v1496
    %v1498 = vmul.f32 1.0, %v1497
    %v1499 = vmul.f32 %v1331, %v1498
    %v1500 = vxor.u32 %v1489, 2147483648
    %v1501 = vmul.f32 %v1500, 1.442695
    %v1502 = vpow.pop %v1501
    %v1503 = vadd.f32 %v1502, 1.0
    %v1504 = vrcp.pop %v1503
    %v1505 = vmul.f32 1.0, %v1504
    %v1506 = vtanh.pop %v1491
    %v1507 = vmul.f32 %v1505, %v1506
    %v1508 = vadd.f32 %v1499, %v1507
    %v1509 = vtanh.pop %v1508
    %v1510 = vxor.u32 %v1492, 2147483648
    %v1511 = vmul.f32 %v1510, 1.442695
    %v1512 = vpow.pop %v1511
    %v1513 = vadd.f32 %v1512, 1.0
    %v1514 = vrcp.pop %v1513
    %v1515 = vmul.f32 1.0, %v1514
    %v1516 = vmul.f32 %v1509, %v1515
    %s1517 = smul.u32 6, 4
    %s1518 = smul.addr %s1517, 8
    %s1519 = scalar_lea.vmem [#allocation2], %s1518
    %v1520 = vld [vmem:[%s1519] sm:$0xff]
    %v1521 = vld [vmem:[%s1519 + $0x8] sm:$0xff]
    %v1522 = vld [vmem:[%s1519 + $0x10] sm:$0xff]
    %v1523 = vld [vmem:[%s1519 + $0x18] sm:$0xff]
    %1524 = vmatprep.subr.mxu0 %v390
    %1525 = vmatpush1.msra.mxu0 %v389
    %1526 = vmatprep.subr.mxu0 %v394
    %1527 = vmatpush1.msra.mxu0 %v393
    %1528 = vmatprep.subr.mxu0 %v398
    %1529 = vmatpush1.msra.mxu0 %v397
    %1530 = vmatprep.subr.mxu0 %v402
    %1531 = vmatpush1.msra.mxu0 %v401
    %1532 = vmatprep.subr.mxu0 %v406
    %1533 = vmatpush1.msra.mxu0 %v405
    %1534 = vmatprep.subr.mxu0 %v410
    %1535 = vmatpush1.msra.mxu0 %v409
    %1536 = vmatprep.subr.mxu0 %v414
    %1537 = vmatpush1.msra.mxu0 %v413
    %1538 = vmatprep.subr.mxu0 %v418
    %1539 = vmatpush1.msra.mxu0 %v417
    %1540 = vmatprep.subr.mxu0 %v422
    %1541 = vmatpush1.msra.mxu0 %v421
    %1542 = vmatprep.subr.mxu0 %v426
    %1543 = vmatpush1.msra.mxu0 %v425
    %1544 = vmatprep.subr.mxu0 %v430
    %1545 = vmatpush1.msra.mxu0 %v429
    %1546 = vmatprep.subr.mxu0 %v434
    %1547 = vmatpush1.msra.mxu0 %v433
    %1548 = vmatprep.subr.mxu0 %v438
    %1549 = vmatpush1.msra.mxu0 %v437
    %1550 = vmatprep.subr.mxu0 %v442
    %1551 = vmatpush1.msra.mxu0 %v441
    %1552 = vmatprep.subr.mxu0 %v446
    %1553 = vmatpush1.msra.mxu0 %v445
    %1554 = vmatprep.subr.mxu0 %v450
    %1555 = vmatpush1.msra.mxu0 %v449
    %1556 = vmatprep.subr.mxu0 0.0
    %1557 = vmatpush1.msra.mxu0 0.0
    %1558 = vmatprep.subr.mxu0 0.0
    %1559 = vmatpush1.msra.mxu0 0.0
    %1560 = vmatprep.subr.mxu0 0.0
    %1561 = vmatpush1.msra.mxu0 0.0
    %1562 = vmatprep.subr.mxu0 0.0
    %1563 = vmatpush1.msra.mxu0 0.0
    %1564 = vmatprep.subr.mxu0 0.0
    %1565 = vmatpush1.msra.mxu0 0.0
    %1566 = vmatprep.subr.mxu0 0.0
    %1567 = vmatpush1.msra.mxu0 0.0
    %1568 = vmatprep.subr.mxu0 0.0
    %1569 = vmatpush1.msra.mxu0 0.0
    %1570 = vmatprep.subr.mxu0 0.0
    %1571 = vmatpush1.msra.mxu0 0.0
    %1572 = vmatprep.subr.mxu0 0.0
    %1573 = vmatpush1.msra.mxu0 0.0
    %1574 = vmatprep.subr.mxu0 0.0
    %1575 = vmatpush1.msra.mxu0 0.0
    %1576 = vmatprep.subr.mxu0 0.0
    %1577 = vmatpush1.msra.mxu0 0.0
    %1578 = vmatprep.subr.mxu0 0.0
    %1579 = vmatpush1.msra.mxu0 0.0
    %1580 = vmatprep.subr.mxu0 0.0
    %1581 = vmatpush1.msra.mxu0 0.0
    %1582 = vmatprep.subr.mxu0 0.0
    %1583 = vmatpush1.msra.mxu0 0.0
    %1584 = vmatprep.subr.mxu0 0.0
    %1585 = vmatpush1.msra.mxu0 0.0
    %1586 = vmatprep.subr.mxu0 0.0
    %1587 = vmatpush1.msra.mxu0 0.0
    %1588 = vmatprep.mubr.f32.mxu0 0.0
    %1589 = vmatmul.mubr.f32.gmra.mrb[0].mxu0 %v1516
    %v1590 = vpop.f32.mrb[0].mxu0
    %v1591 = vadd.f32 0.0, %v1590
    %v1592 = vpop.f32.mrb[0].mxu0
    %v1593 = vadd.f32 0.0, %v1592
    %1594 = vdwg.mxu0
    %1595 = vmatprep.subr.mxu0 %v392
    %1596 = vmatpush1.msra.mxu0 %v391
    %1597 = vmatprep.subr.mxu0 %v396
    %1598 = vmatpush1.msra.mxu0 %v395
    %1599 = vmatprep.subr.mxu0 %v400
    %1600 = vmatpush1.msra.mxu0 %v399
    %1601 = vmatprep.subr.mxu0 %v404
    %1602 = vmatpush1.msra.mxu0 %v403
    %1603 = vmatprep.subr.mxu0 %v408
    %1604 = vmatpush1.msra.mxu0 %v407
    %1605 = vmatprep.subr.mxu0 %v412
    %1606 = vmatpush1.msra.mxu0 %v411
    %1607 = vmatprep.subr.mxu0 %v416
    %1608 = vmatpush1.msra.mxu0 %v415
    %1609 = vmatprep.subr.mxu0 %v420
    %1610 = vmatpush1.msra.mxu0 %v419
    %1611 = vmatprep.subr.mxu0 %v424
    %1612 = vmatpush1.msra.mxu0 %v423
    %1613 = vmatprep.subr.mxu0 %v428
    %1614 = vmatpush1.msra.mxu0 %v427
    %1615 = vmatprep.subr.mxu0 %v432
    %1616 = vmatpush1.msra.mxu0 %v431
    %1617 = vmatprep.subr.mxu0 %v436
    %1618 = vmatpush1.msra.mxu0 %v435
    %1619 = vmatprep.subr.mxu0 %v440
    %1620 = vmatpush1.msra.mxu0 %v439
    %1621 = vmatprep.subr.mxu0 %v444
    %1622 = vmatpush1.msra.mxu0 %v443
    %1623 = vmatprep.subr.mxu0 %v448
    %1624 = vmatpush1.msra.mxu0 %v447
    %1625 = vmatprep.subr.mxu0 %v452
    %1626 = vmatpush1.msra.mxu0 %v451
    %1627 = vmatprep.subr.mxu0 0.0
    %1628 = vmatpush1.msra.mxu0 0.0
    %1629 = vmatprep.subr.mxu0 0.0
    %1630 = vmatpush1.msra.mxu0 0.0
    %1631 = vmatprep.subr.mxu0 0.0
    %1632 = vmatpush1.msra.mxu0 0.0
    %1633 = vmatprep.subr.mxu0 0.0
    %1634 = vmatpush1.msra.mxu0 0.0
    %1635 = vmatprep.subr.mxu0 0.0
    %1636 = vmatpush1.msra.mxu0 0.0
    %1637 = vmatprep.subr.mxu0 0.0
    %1638 = vmatpush1.msra.mxu0 0.0
    %1639 = vmatprep.subr.mxu0 0.0
    %1640 = vmatpush1.msra.mxu0 0.0
    %1641 = vmatprep.subr.mxu0 0.0
    %1642 = vmatpush1.msra.mxu0 0.0
    %1643 = vmatprep.subr.mxu0 0.0
    %1644 = vmatpush1.msra.mxu0 0.0
    %1645 = vmatprep.subr.mxu0 0.0
    %1646 = vmatpush1.msra.mxu0 0.0
    %1647 = vmatprep.subr.mxu0 0.0
    %1648 = vmatpush1.msra.mxu0 0.0
    %1649 = vmatprep.subr.mxu0 0.0
    %1650 = vmatpush1.msra.mxu0 0.0
    %1651 = vmatprep.subr.mxu0 0.0
    %1652 = vmatpush1.msra.mxu0 0.0
    %1653 = vmatprep.subr.mxu0 0.0
    %1654 = vmatpush1.msra.mxu0 0.0
    %1655 = vmatprep.subr.mxu0 0.0
    %1656 = vmatpush1.msra.mxu0 0.0
    %1657 = vmatprep.subr.mxu0 0.0
    %1658 = vmatpush1.msra.mxu0 0.0
    %1659 = vmatprep.mubr.f32.mxu0 0.0
    %1660 = vmatmul.mubr.f32.gmra.mrb[0].mxu0 %v1516
    %v1661 = vpop.f32.mrb[0].mxu0
    %v1662 = vadd.f32 0.0, %v1661
    %v1663 = vpop.f32.mrb[0].mxu0
    %v1664 = vadd.f32 0.0, %v1663
    %1665 = vdwg.mxu0
    %v1666 = vadd.f32 %v1520, %v1591
    %v1667 = vadd.f32 %v1521, %v1593
    %v1668 = vadd.f32 %v1522, %v1662
    %v1669 = vadd.f32 %v1523, %v1664
    %v1670 = vxor.u32 %v1667, 2147483648
    %v1671 = vmul.f32 %v1670, 1.442695
    %v1672 = vpow.pop %v1671
    %v1673 = vadd.f32 %v1672, 1.0
    %v1674 = vrcp.pop %v1673
    %v1675 = vmul.f32 1.0, %v1674
    %v1676 = vmul.f32 %v1508, %v1675
    %v1677 = vxor.u32 %v1666, 2147483648
    %v1678 = vmul.f32 %v1677, 1.442695
    %v1679 = vpow.pop %v1678
    %v1680 = vadd.f32 %v1679, 1.0
    %v1681 = vrcp.pop %v1680
    %v1682 = vmul.f32 1.0, %v1681
    %v1683 = vtanh.pop %v1668
    %v1684 = vmul.f32 %v1682, %v1683
    %v1685 = vadd.f32 %v1676, %v1684
    %v1686 = vtanh.pop %v1685
    %v1687 = vxor.u32 %v1669, 2147483648
    %v1688 = vmul.f32 %v1687, 1.442695
    %v1689 = vpow.pop %v1688
    %v1690 = vadd.f32 %v1689, 1.0
    %v1691 = vrcp.pop %v1690
    %v1692 = vmul.f32 1.0, %v1691
    %v1693 = vmul.f32 %v1686, %v1692
    %s1694 = smul.u32 7, 4
    %s1695 = smul.addr %s1694, 8
    %s1696 = scalar_lea.vmem [#allocation2], %s1695
    %v1697 = vld [vmem:[%s1696] sm:$0xff]
    %v1698 = vld [vmem:[%s1696 + $0x8] sm:$0xff]
    %v1699 = vld [vmem:[%s1696 + $0x10] sm:$0xff]
    %v1700 = vld [vmem:[%s1696 + $0x18] sm:$0xff]
    %1701 = vmatprep.subr.mxu0 %v390
    %1702 = vmatpush1.msra.mxu0 %v389
    %1703 = vmatprep.subr.mxu0 %v394
    %1704 = vmatpush1.msra.mxu0 %v393
    %1705 = vmatprep.subr.mxu0 %v398
    %1706 = vmatpush1.msra.mxu0 %v397
    %1707 = vmatprep.subr.mxu0 %v402
    %1708 = vmatpush1.msra.mxu0 %v401
    %1709 = vmatprep.subr.mxu0 %v406
    %1710 = vmatpush1.msra.mxu0 %v405
    %1711 = vmatprep.subr.mxu0 %v410
    %1712 = vmatpush1.msra.mxu0 %v409
    %1713 = vmatprep.subr.mxu0 %v414
    %1714 = vmatpush1.msra.mxu0 %v413
    %1715 = vmatprep.subr.mxu0 %v418
    %1716 = vmatpush1.msra.mxu0 %v417
    %1717 = vmatprep.subr.mxu0 %v422
    %1718 = vmatpush1.msra.mxu0 %v421
    %1719 = vmatprep.subr.mxu0 %v426
    %1720 = vmatpush1.msra.mxu0 %v425
    %1721 = vmatprep.subr.mxu0 %v430
    %1722 = vmatpush1.msra.mxu0 %v429
    %1723 = vmatprep.subr.mxu0 %v434
    %1724 = vmatpush1.msra.mxu0 %v433
    %1725 = vmatprep.subr.mxu0 %v438
    %1726 = vmatpush1.msra.mxu0 %v437
    %1727 = vmatprep.subr.mxu0 %v442
    %1728 = vmatpush1.msra.mxu0 %v441
    %1729 = vmatprep.subr.mxu0 %v446
    %1730 = vmatpush1.msra.mxu0 %v445
    %1731 = vmatprep.subr.mxu0 %v450
    %1732 = vmatpush1.msra.mxu0 %v449
    %1733 = vmatprep.subr.mxu0 0.0
    %1734 = vmatpush1.msra.mxu0 0.0
    %1735 = vmatprep.subr.mxu0 0.0
    %1736 = vmatpush1.msra.mxu0 0.0
    %1737 = vmatprep.subr.mxu0 0.0
    %1738 = vmatpush1.msra.mxu0 0.0
    %1739 = vmatprep.subr.mxu0 0.0
    %1740 = vmatpush1.msra.mxu0 0.0
    %1741 = vmatprep.subr.mxu0 0.0
    %1742 = vmatpush1.msra.mxu0 0.0
    %1743 = vmatprep.subr.mxu0 0.0
    %1744 = vmatpush1.msra.mxu0 0.0
    %1745 = vmatprep.subr.mxu0 0.0
    %1746 = vmatpush1.msra.mxu0 0.0
    %1747 = vmatprep.subr.mxu0 0.0
    %1748 = vmatpush1.msra.mxu0 0.0
    %1749 = vmatprep.subr.mxu0 0.0
    %1750 = vmatpush1.msra.mxu0 0.0
    %1751 = vmatprep.subr.mxu0 0.0
    %1752 = vmatpush1.msra.mxu0 0.0
    %1753 = vmatprep.subr.mxu0 0.0
    %1754 = vmatpush1.msra.mxu0 0.0
    %1755 = vmatprep.subr.mxu0 0.0
    %1756 = vmatpush1.msra.mxu0 0.0
    %1757 = vmatprep.subr.mxu0 0.0
    %1758 = vmatpush1.msra.mxu0 0.0
    %1759 = vmatprep.subr.mxu0 0.0
    %1760 = vmatpush1.msra.mxu0 0.0
    %1761 = vmatprep.subr.mxu0 0.0
    %1762 = vmatpush1.msra.mxu0 0.0
    %1763 = vmatprep.subr.mxu0 0.0
    %1764 = vmatpush1.msra.mxu0 0.0
    %1765 = vmatprep.mubr.f32.mxu0 0.0
    %1766 = vmatmul.mubr.f32.gmra.mrb[0].mxu0 %v1693
    %v1767 = vpop.f32.mrb[0].mxu0
    %v1768 = vadd.f32 0.0, %v1767
    %v1769 = vpop.f32.mrb[0].mxu0
    %v1770 = vadd.f32 0.0, %v1769
    %1771 = vdwg.mxu0
    %1772 = vmatprep.subr.mxu0 %v392
    %1773 = vmatpush1.msra.mxu0 %v391
    %1774 = vmatprep.subr.mxu0 %v396
    %1775 = vmatpush1.msra.mxu0 %v395
    %1776 = vmatprep.subr.mxu0 %v400
    %1777 = vmatpush1.msra.mxu0 %v399
    %1778 = vmatprep.subr.mxu0 %v404
    %1779 = vmatpush1.msra.mxu0 %v403
    %1780 = vmatprep.subr.mxu0 %v408
    %1781 = vmatpush1.msra.mxu0 %v407
    %1782 = vmatprep.subr.mxu0 %v412
    %1783 = vmatpush1.msra.mxu0 %v411
    %1784 = vmatprep.subr.mxu0 %v416
    %1785 = vmatpush1.msra.mxu0 %v415
    %1786 = vmatprep.subr.mxu0 %v420
    %1787 = vmatpush1.msra.mxu0 %v419
    %1788 = vmatprep.subr.mxu0 %v424
    %1789 = vmatpush1.msra.mxu0 %v423
    %1790 = vmatprep.subr.mxu0 %v428
    %1791 = vmatpush1.msra.mxu0 %v427
    %1792 = vmatprep.subr.mxu0 %v432
    %1793 = vmatpush1.msra.mxu0 %v431
    %1794 = vmatprep.subr.mxu0 %v436
    %1795 = vmatpush1.msra.mxu0 %v435
    %1796 = vmatprep.subr.mxu0 %v440
    %1797 = vmatpush1.msra.mxu0 %v439
    %1798 = vmatprep.subr.mxu0 %v444
    %1799 = vmatpush1.msra.mxu0 %v443
    %1800 = vmatprep.subr.mxu0 %v448
    %1801 = vmatpush1.msra.mxu0 %v447
    %1802 = vmatprep.subr.mxu0 %v452
    %1803 = vmatpush1.msra.mxu0 %v451
    %1804 = vmatprep.subr.mxu0 0.0
    %1805 = vmatpush1.msra.mxu0 0.0
    %1806 = vmatprep.subr.mxu0 0.0
    %1807 = vmatpush1.msra.mxu0 0.0
    %1808 = vmatprep.subr.mxu0 0.0
    %1809 = vmatpush1.msra.mxu0 0.0
    %1810 = vmatprep.subr.mxu0 0.0
    %1811 = vmatpush1.msra.mxu0 0.0
    %1812 = vmatprep.subr.mxu0 0.0
    %1813 = vmatpush1.msra.mxu0 0.0
    %1814 = vmatprep.subr.mxu0 0.0
    %1815 = vmatpush1.msra.mxu0 0.0
    %1816 = vmatprep.subr.mxu0 0.0
    %1817 = vmatpush1.msra.mxu0 0.0
    %1818 = vmatprep.subr.mxu0 0.0
    %1819 = vmatpush1.msra.mxu0 0.0
    %1820 = vmatprep.subr.mxu0 0.0
    %1821 = vmatpush1.msra.mxu0 0.0
    %1822 = vmatprep.subr.mxu0 0.0
    %1823 = vmatpush1.msra.mxu0 0.0
    %1824 = vmatprep.subr.mxu0 0.0
    %1825 = vmatpush1.msra.mxu0 0.0
    %1826 = vmatprep.subr.mxu0 0.0
    %1827 = vmatpush1.msra.mxu0 0.0
    %1828 = vmatprep.subr.mxu0 0.0
    %1829 = vmatpush1.msra.mxu0 0.0
    %1830 = vmatprep.subr.mxu0 0.0
    %1831 = vmatpush1.msra.mxu0 0.0
    %1832 = vmatprep.subr.mxu0 0.0
    %1833 = vmatpush1.msra.mxu0 0.0
    %1834 = vmatprep.subr.mxu0 0.0
    %1835 = vmatpush1.msra.mxu0 0.0
    %1836 = vmatprep.mubr.f32.mxu0 0.0
    %1837 = vmatmul.mubr.f32.gmra.mrb[0].mxu0 %v1693
    %v1838 = vpop.f32.mrb[0].mxu0
    %v1839 = vadd.f32 0.0, %v1838
    %v1840 = vpop.f32.mrb[0].mxu0
    %v1841 = vadd.f32 0.0, %v1840
    %1842 = vdwg.mxu0
    %v1843 = vadd.f32 %v1697, %v1768
    %v1844 = vadd.f32 %v1698, %v1770
    %v1845 = vadd.f32 %v1699, %v1839
    %v1846 = vadd.f32 %v1700, %v1841
    %v1847 = vxor.u32 %v1844, 2147483648
    %v1848 = vmul.f32 %v1847, 1.442695
    %v1849 = vpow.pop %v1848
    %v1850 = vadd.f32 %v1849, 1.0
    %v1851 = vrcp.pop %v1850
    %v1852 = vmul.f32 1.0, %v1851
    %v1853 = vmul.f32 %v1685, %v1852
    %v1854 = vxor.u32 %v1843, 2147483648
    %v1855 = vmul.f32 %v1854, 1.442695
    %v1856 = vpow.pop %v1855
    %v1857 = vadd.f32 %v1856, 1.0
    %v1858 = vrcp.pop %v1857
    %v1859 = vmul.f32 1.0, %v1858
    %v1860 = vtanh.pop %v1845
    %v1861 = vmul.f32 %v1859, %v1860
    %v1862 = vadd.f32 %v1853, %v1861
    %v1863 = vtanh.pop %v1862
    %v1864 = vxor.u32 %v1846, 2147483648
    %v1865 = vmul.f32 %v1864, 1.442695
    %v1866 = vpow.pop %v1865
    %v1867 = vadd.f32 %v1866, 1.0
    %v1868 = vrcp.pop %v1867
    %v1869 = vmul.f32 1.0, %v1868
    %v1870 = vmul.f32 %v1863, %v1869
    %1871 = vst [vmem:[#allocation3] sm:$0xff] %v1870
    %1872 = vst [vmem:[#allocation4] sm:$0xff] %v1862
    // Predicated region
    $region34: #{tpu_custom_call.1} parent=1 // pred_check
      %p1873 = pneg %p62
    $region35: #{tpu_custom_call.1} parent=1 // pred_check_branch
      %1875 = sbr.rel (%p1873) target = $region37
    $region36: #{tpu_custom_call.1} parent=1 // pred_region
      %1876 = vst [vmem:[#allocation11] sm:$0xff] %v1870
      %1877 = vst [vmem:[#allocation12] sm:$0xff] %v1862
    $region37: #{tpu_custom_call.1} parent=1 // pred_fallthru
      _
    // Predicated region
    $region38: #{tpu_custom_call.1} parent=1 // pred_check
      _
    $region39: #{tpu_custom_call.1} parent=1 // pred_check_branch
      %1879 = sbr.rel (0) target = $region41
    $region40: #{tpu_custom_call.1} parent=1 // pred_region
      %s1881 = ssub.s32 128, 128
      %1882 = vsyncadd [#allocation7], %s1881
      %s1884 = sshll.u32 [#allocation11], 4
      %s1885 = int_to_ptr.vmem [resolvable:$true] %s1884
      %1887 = dma.vmem_to_hbm [thread:$0]  %s1885, 128, %s4, [#allocation7]
    $region41: #{tpu_custom_call.1} parent=1 // pred_fallthru
      _
    // Predicated region
    $region42: #{tpu_custom_call.1} parent=1 // pred_check
      _
    $region43: #{tpu_custom_call.1} parent=1 // pred_check_branch
      %1889 = sbr.rel (0) target = $region45
    $region44: #{tpu_custom_call.1} parent=1 // pred_region
      %s1891 = ssub.s32 128, 128
      %1892 = vsyncadd [#allocation13], %s1891
      %s1894 = sshll.u32 [#allocation12], 4
      %s1895 = int_to_ptr.vmem [resolvable:$true] %s1894
      %1897 = dma.vmem_to_hbm [thread:$0]  %s1895, 128, %s5, [#allocation13]
    $region45: #{tpu_custom_call.1} parent=1 // pred_fallthru
      _
    // Predicated region
    $region46: #{tpu_custom_call.1} parent=1 // pred_check
      _
    $region47: #{tpu_custom_call.1} parent=1 // pred_check_branch
      %1899 = sbr.rel (0) target = $region49
    $region48: #{tpu_custom_call.1} parent=1 // pred_region
      %1900 = dma.done [#allocation7], 128
    $region49: #{tpu_custom_call.1} parent=1 // pred_fallthru
      _
    // Predicated region
    $region50: #{tpu_custom_call.1} parent=1 // pred_check
      _
    $region51: #{tpu_custom_call.1} parent=1 // pred_check_branch
      %1902 = sbr.rel (0) target = $region53
    $region52: #{tpu_custom_call.1} parent=1 // pred_region
      %1903 = dma.done [#allocation13], 128
    $region53: #{tpu_custom_call.1} parent=1 // pred_fallthru
      _
    %1904 = vsyncpa [#allocation6], 1
    %1905 = vsyncpa [#allocation9], 1
    %1906 = vsyncpa [#allocation7], 1
    %1907 = vsyncpa [#allocation13], 1

</llo_original>
